<compile_context>
chip_gen: v6e
topology: v6e:2x2x1
jax: 0.10.0
libtpu: 0.0.40
codegen_flags: <defaults>
</compile_context>

<pallas_src>
import functools
import math

import jax
import jax.numpy as jnp
from jax import lax
from jax.experimental import pallas as pl
from jax.experimental.pallas import tpu as pltpu

# ---- model hyper-parameters (SchNet defaults, scaled down) ----------------
DIM1 = DIM2 = DIM3 = 32          # dim1 / dim2 / dim3
NUM_FEATURES = 16                # data.num_features
NUM_EDGE_FEATURES = 16           # data.num_edge_features
CUTOFF = 8.0
GC_COUNT = 3                     # gc_count
BN_EPS = 1e-5
LOG2 = math.log(2.0)

assert DIM1 == DIM2 == DIM3      # required by the bias/head packing below


def _relu(x):
    return jnp.maximum(x, 0.0)


def _ssp(x):
    # ShiftedSoftplus: softplus(x) - log(2), numerically stable form.
    return jnp.maximum(x, 0.0) + jnp.log(1.0 + jnp.exp(-jnp.abs(x))) - LOG2


def _round_up(v, m):
    return ((v + m - 1) // m) * m


def schnet_kernel(x_ref, poolT_ref, c_ref, ea_ref, src_ref, dstT_ref,
                  mlp_w1_ref, mlp_w2_ref, cf1_w_ref, cf2_w_ref, ib_w_ref,
                  bias_ref, pre_w_ref, post_w_ref, head_ref,
                  o_ref, h_scr, hh_scr, agg_scr):
    f32 = jnp.float32
    bf16 = jnp.bfloat16
    l = pl.program_id(0)
    e = pl.program_id(1)
    last_l = pl.num_programs(0) - 1
    last_e = pl.num_programs(1) - 1

    head = head_ref[...]                       # [8, D]  packed head vectors
    b = bias_ref[0]                            # [8, D]  packed per-layer rows

    # ---- pre-FC: Linear(F, dim1) + relu (very first grid point only) -----
    @pl.when(jnp.logical_and(l == 0, e == 0))
    def _pre_fc():
        h_scr[...] = _relu(
            jnp.dot(x_ref[...], pre_w_ref[...], preferred_element_type=f32)
            + head[0:1, :])                                          # [N, D1]

    # ---- per-layer init: CFConv lin1 (no bias), zero scatter accumulator -
    @pl.when(e == 0)
    def _layer_init():
        hh_scr[...] = jnp.dot(h_scr[...].astype(bf16), cf1_w_ref[0],
                              preferred_element_type=f32).astype(bf16)
        agg_scr[...] = jnp.zeros_like(agg_scr)

    # ---- per-edge-tile CFConv work ----------------------------------------
    C = c_ref[...]                                                   # [Et, 1]
    # filter MLP: Linear -> ssp -> Linear, scaled by (precomputed) cutoff C
    W = _ssp(jnp.dot(ea_ref[...], mlp_w1_ref[0],
                     preferred_element_type=f32) + b[0:1, :])
    W = jnp.dot(W.astype(bf16), mlp_w2_ref[0],
                preferred_element_type=f32) + b[1:2, :]
    W = W * C                                                        # [Et, D3]

    # gather x_j via a bf16 one-hot matmul (exact gather, f32 accumulation);
    # the one-hot slabs are VMEM-resident, tile picked by leading-axis index.
    src_t = src_ref[e]                                               # [Et, N]
    dstT_t = dstT_ref[e]                                             # [N, Et]
    h_src = jnp.dot(src_t, hh_scr[...], preferred_element_type=f32)  # [Et, D3]
    msg = (h_src * W).astype(bf16)                                   # [Et, D3]
    # scatter-add with the pre-transposed dst one-hot: plain MXU matmul.
    agg_scr[...] += jnp.dot(dstT_t, msg, preferred_element_type=f32)

    # ---- layer finalize: lin2 -> ssp -> Linear, residual + folded BN -----
    @pl.when(e == last_e)
    def _layer_final():
        cf = jnp.dot(agg_scr[...].astype(bf16), cf2_w_ref[0],
                     preferred_element_type=f32) + b[2:3, :]
        ib = jnp.dot(_ssp(cf).astype(bf16), ib_w_ref[0],
                     preferred_element_type=f32) + b[3:4, :]
        h = h_scr[...] + ib
        h_scr[...] = h * b[4:5, :] + b[5:6, :]   # folded eval-mode BatchNorm
        # TODO(synk): F.dropout(p=0.2) is identity at inference; omitted.

    # ---- pool ('early', global_mean_pool) + post-FC + output head --------
    @pl.when(jnp.logical_and(l == last_l, e == last_e))
    def _head():
        h = h_scr[...]
        pooled = jnp.dot(poolT_ref[...], h, preferred_element_type=f32)  # [G, D1]
        p = _relu(jnp.dot(pooled.astype(bf16), post_w_ref[...],
                          preferred_element_type=f32) + head[1:2, :])
        # output head as a VPU/XLU lane reduction (out_w is a single column)
        o_ref[...] = (jnp.sum(p * head[2:3, :], axis=-1, keepdims=True)
                      + head[3:4, 0:1])                              # [G, 1]


def init_params(key):
    ks = iter(jax.random.split(key, 32))

    def nrm(shape, scale=0.1):
        return (scale * jax.random.normal(next(ks), shape)).astype(jnp.float32)

    return dict(
        pre_w=nrm((NUM_FEATURES, DIM1)), pre_b=nrm((1, DIM1)),
        mlp_w1=nrm((GC_COUNT, NUM_EDGE_FEATURES, DIM3)), mlp_b1=nrm((GC_COUNT, 1, DIM3)),
        mlp_w2=nrm((GC_COUNT, DIM3, DIM3)), mlp_b2=nrm((GC_COUNT, 1, DIM3)),
        cf1_w=nrm((GC_COUNT, DIM1, DIM3)),
        cf2_w=nrm((GC_COUNT, DIM3, DIM1)), cf2_b=nrm((GC_COUNT, 1, DIM1)),
        ib_w=nrm((GC_COUNT, DIM1, DIM1)), ib_b=nrm((GC_COUNT, 1, DIM1)),
        bn_g=jnp.ones((GC_COUNT, 1, DIM1), jnp.float32),
        bn_b=jnp.zeros((GC_COUNT, 1, DIM1), jnp.float32),
        bn_m=jnp.zeros((GC_COUNT, 1, DIM1), jnp.float32),
        bn_v=jnp.ones((GC_COUNT, 1, DIM1), jnp.float32),
        post_w=nrm((DIM1, DIM2)), post_b=nrm((1, DIM2)),
        out_w=nrm((DIM2, 1)), out_b=nrm((1, 1)),
    )


def schnet_forward(x, edge_index, edge_weight, edge_attr, batch, num_graphs,
                   params, e_tile=256):
    assert e_tile % 128 == 0, "e_tile must be a multiple of 128 (lane-dense)"
    f32 = jnp.float32
    bf16 = jnp.bfloat16
    N, F = x.shape
    E = edge_index.shape[1]
    G = num_graphs

    # ---- glue: padding, bf16 one-hots, packed biases (plain JAX) ---------
    N_pad = _round_up(N, 8)
    E_pad = _round_up(E, e_tile)
    n_et = E_pad // e_tile
    pad_e = E_pad - E

    x_p = jnp.zeros((N_pad, F), bf16).at[:N, :].set(x.astype(bf16))

    src_idx = jnp.concatenate([edge_index[0].astype(jnp.int32),
                               jnp.full((pad_e,), -1, jnp.int32)])
    dst_idx = jnp.concatenate([edge_index[1].astype(jnp.int32),
                               jnp.full((pad_e,), -1, jnp.int32)])
    # one-hot of -1 is an all-zero row -> padded edges contribute nothing.
    src_oh = jax.nn.one_hot(src_idx, N_pad, dtype=bf16)          # [E_pad, N_pad]
    dst_oh = jax.nn.one_hot(dst_idx, N_pad, dtype=bf16)          # [E_pad, N_pad]
    # Pre-tile: gather operand [n_et, e_tile, N_pad]; scatter operand is the
    # transpose, pre-tiled along the (lane) edge axis: [n_et, N_pad, e_tile].
    src3 = src_oh.reshape(n_et, e_tile, N_pad)
    dstT3 = dst_oh.reshape(n_et, e_tile, N_pad).transpose(0, 2, 1)

    ea_p = jnp.zeros((E_pad, NUM_EDGE_FEATURES), bf16).at[:E, :].set(
        edge_attr.astype(bf16))
    # cosine cutoff precomputed outside the kernel
    c = 0.5 * (jnp.cos(edge_weight.astype(f32) * (math.pi / CUTOFF)) + 1.0)
    c_p = jnp.zeros((E_pad, 1), f32).at[:E, 0].set(c)

    batch_p = jnp.concatenate([batch.astype(jnp.int32),
                               jnp.full((N_pad - N,), -1, jnp.int32)])
    b_oh = jax.nn.one_hot(batch_p, G, dtype=f32)                  # [N_pad, G]
    counts = jnp.maximum(b_oh.sum(axis=0), 1.0)                   # [G]
    poolT = b_oh.T / counts[:, None]                              # [G, N_pad]

    # fold eval-mode BatchNorm into scale/shift; pack all per-layer rows
    bn_scale = params['bn_g'] * lax.rsqrt(params['bn_v'] + BN_EPS)
    bn_shift = params['bn_b'] - params['bn_m'] * bn_scale
    biases = jnp.concatenate(
        [params['mlp_b1'], params['mlp_b2'], params['cf2_b'], params['ib_b'],
         bn_scale, bn_shift, jnp.zeros((GC_COUNT, 2, DIM1), f32)], axis=1)  # [GC,8,D]

    head = jnp.zeros((8, DIM1), f32)
    head = head.at[0, :].set(params['pre_b'][0])
    head = head.at[1, :].set(params['post_b'][0])
    head = head.at[2, :].set(params['out_w'][:, 0])
    head = head.at[3, 0].set(params['out_b'][0, 0])

    inputs = [
        x_p, poolT, c_p, ea_p, src3, dstT3,
        params['mlp_w1'].astype(bf16), params['mlp_w2'].astype(bf16),
        params['cf1_w'].astype(bf16), params['cf2_w'].astype(bf16),
        params['ib_w'].astype(bf16), biases,
        params['pre_w'].astype(bf16), params['post_w'].astype(bf16), head,
    ]

    const2 = lambda l, e: (0, 0)
    const3 = lambda l, e: (0, 0, 0)
    etile2 = lambda l, e: (e, 0)
    lsel3 = lambda l, e: (l, 0, 0)

    in_specs = [
        pl.BlockSpec((N_pad, F), const2),                  # x (bf16)
        pl.BlockSpec((G, N_pad), const2),                  # pool^T (f32)
        pl.BlockSpec((e_tile, 1), etile2),                 # cutoff C (f32)
        pl.BlockSpec((e_tile, NUM_EDGE_FEATURES), etile2), # edge_attr (bf16)
        pl.BlockSpec((n_et, e_tile, N_pad), const3),       # src one-hot, VMEM-resident
        pl.BlockSpec((n_et, N_pad, e_tile), const3),       # dst^T one-hot, VMEM-resident
        pl.BlockSpec((1, NUM_EDGE_FEATURES, DIM3), lsel3), # mlp_w1
        pl.BlockSpec((1, DIM3, DIM3), lsel3),              # mlp_w2
        pl.BlockSpec((1, DIM1, DIM3), lsel3),              # cf1_w
        pl.BlockSpec((1, DIM3, DIM1), lsel3),              # cf2_w
        pl.BlockSpec((1, DIM1, DIM1), lsel3),              # ib_w
        pl.BlockSpec((1, 8, DIM1), lsel3),                 # packed per-layer biases
        pl.BlockSpec((F, DIM1), const2),                   # pre_w
        pl.BlockSpec((DIM1, DIM2), const2),                # post_w
        pl.BlockSpec((8, DIM1), const2),                   # packed head vectors
    ]

    # Explicit VMEM budget: one-hot slabs (double-buffered), edge tiles,
    # scratch, weights.  Clamp to [32 MiB, 48 MiB] so the budget stays legal
    # on v7x (64 MiB physical VMEM) as well as v5e/v6e (128 MiB).
    est = (2 * 2 * E_pad * N_pad * 2                      # src3 + dstT3 (bf16, 2 buffers)
           + 2 * e_tile * (NUM_EDGE_FEATURES * 2 + 4)     # ea + C tiles (2 buffers)
           + N_pad * (F * 2 + G * 4)                      # x + poolT
           + N_pad * (DIM1 * 4 + DIM3 * 2 + DIM3 * 4)     # scratch h / hh / agg
           + GC_COUNT * 5 * DIM1 * DIM1 * 2 * 2           # per-layer weights (2 buffers)
           + (8 + 8 + F + DIM1) * DIM1 * 4)               # biases / head / pre / post
    vmem_limit = int(min(max(4 * est, 32 * 1024 * 1024), 48 * 1024 * 1024))

    out = pl.pallas_call(
        schnet_kernel,
        out_shape=jax.ShapeDtypeStruct((G, 1), f32),
        grid=(GC_COUNT, n_et),
        in_specs=in_specs,
        out_specs=pl.BlockSpec((G, 1), const2),
        scratch_shapes=[
            pltpu.VMEM((N_pad, DIM1), f32),     # h (node features)
            pltpu.VMEM((N_pad, DIM3), bf16),    # hh = h @ cf1_w (MXU operand)
            pltpu.VMEM((N_pad, DIM3), f32),     # scatter-add accumulator
        ],
        compiler_params=pltpu.CompilerParams(
            dimension_semantics=("arbitrary", "arbitrary"),
            vmem_limit_bytes=vmem_limit),
    )(*inputs)
    # out.shape[1] == 1 -> out.view(-1)
    return out.reshape(-1)


def schnet_reference(x, edge_index, edge_weight, edge_attr, batch, num_graphs, params):
    """Pure-JAX f32 reference (same math) for a correctness check."""
    N = x.shape[0]
    h = _relu(x @ params['pre_w'] + params['pre_b'])
    C = 0.5 * (jnp.cos(edge_weight.reshape(-1, 1) * (math.pi / CUTOFF)) + 1.0)
    for l in range(GC_COUNT):
        W = _ssp(edge_attr @ params['mlp_w1'][l] + params['mlp_b1'][l]) @ params['mlp_w2'][l] + params['mlp_b2'][l]
        W = W * C
        hh = h @ params['cf1_w'][l]
        msg = hh[edge_index[0]] * W
        agg = jax.ops.segment_sum(msg, edge_index[1], num_segments=N)
        cf = agg @ params['cf2_w'][l] + params['cf2_b'][l]
        ib = _ssp(cf) @ params['ib_w'][l] + params['ib_b'][l]
        h = h + ib
        h = (h - params['bn_m'][l]) * lax.rsqrt(params['bn_v'][l] + BN_EPS) * params['bn_g'][l] + params['bn_b'][l]
    b_onehot = jax.nn.one_hot(batch, num_graphs, dtype=jnp.float32)
    pooled = (b_onehot.T @ h) / jnp.maximum(b_onehot.sum(axis=0), 1.0)[:, None]
    p = _relu(pooled @ params['post_w'] + params['post_b'])
    return (p @ params['out_w'] + params['out_b']).reshape(-1)


if __name__ == "__main__":
    key = jax.random.PRNGKey(0)
    k_param, k_x, k_src, k_dst, k_ew, k_ea = jax.random.split(key, 6)

    N, E, G = 24, 300, 2
    x = jax.random.normal(k_x, (N, NUM_FEATURES), dtype=jnp.float32)
    src = jax.random.randint(k_src, (E,), 0, N)
    dst = jax.random.randint(k_dst, (E,), 0, N)
    edge_index = jnp.stack([src, dst], axis=0)                 # [2, E]
    edge_weight = jax.random.uniform(k_ew, (E,), minval=0.5, maxval=7.5)
    edge_attr = jax.random.normal(k_ea, (E, NUM_EDGE_FEATURES), dtype=jnp.float32)
    batch = jnp.concatenate([jnp.zeros(N // 2, jnp.int32),
                             jnp.ones(N - N // 2, jnp.int32)])

    params = init_params(k_param)

    out = schnet_forward(x, edge_index, edge_weight, edge_attr, batch, G, params)
    out = jax.block_until_ready(out)

    ref = schnet_reference(x, edge_index, edge_weight, edge_attr, batch, G, params)
    assert out.shape == (G,)
    # bf16 MXU operands (f32 accumulation) -> loosened tolerance vs f32 reference
    assert jnp.allclose(out, ref, rtol=2e-2, atol=2e-2), (out, ref)

    print("KERNEL_OK")
</pallas_src>

<mosaic_0001>
module attributes {stable_mosaic.version = 11 : i64} {
  func.func @schnet_kernel(%arg0: i32, %arg1: i32, %arg2: memref<24x16xbf16, #tpu.memory_space<vmem>>, %arg3: memref<2x24xf32, #tpu.memory_space<vmem>>, %arg4: memref<256x1xf32, #tpu.memory_space<vmem>>, %arg5: memref<256x16xbf16, #tpu.memory_space<vmem>>, %arg6: memref<2x256x24xbf16, #tpu.memory_space<vmem>>, %arg7: memref<2x24x256xbf16, #tpu.memory_space<vmem>>, %arg8: memref<1x16x32xbf16, #tpu.memory_space<vmem>>, %arg9: memref<1x32x32xbf16, #tpu.memory_space<vmem>>, %arg10: memref<1x32x32xbf16, #tpu.memory_space<vmem>>, %arg11: memref<1x32x32xbf16, #tpu.memory_space<vmem>>, %arg12: memref<1x32x32xbf16, #tpu.memory_space<vmem>>, %arg13: memref<1x8x32xf32, #tpu.memory_space<vmem>>, %arg14: memref<16x32xbf16, #tpu.memory_space<vmem>>, %arg15: memref<32x32xbf16, #tpu.memory_space<vmem>>, %arg16: memref<8x32xf32, #tpu.memory_space<vmem>>, %arg17: memref<2x1xf32, #tpu.memory_space<vmem>>, %arg18: memref<24x32xf32, #tpu.memory_space<vmem>>, %arg19: memref<24x32xbf16, #tpu.memory_space<vmem>>, %arg20: memref<24x32xf32, #tpu.memory_space<vmem>>) attributes {dimension_semantics = [#tpu.dimension_semantics<arbitrary>, #tpu.dimension_semantics<arbitrary>], iteration_bounds = array<i64: 3, 2>, scalar_prefetch = 0 : i64, scratch_operands = 3 : i64, tpu.core_type = #tpu.core_type<tc>, window_params = [{pipeline_mode = #tpu.pipeline_mode<synchronous>, transform_indices = @transform_0, window_bounds = array<i64: 24, 16>}, {pipeline_mode = #tpu.pipeline_mode<synchronous>, transform_indices = @transform_1, window_bounds = array<i64: 2, 24>}, {transform_indices = @transform_2, window_bounds = array<i64: 256, 1>}, {transform_indices = @transform_3, window_bounds = array<i64: 256, 16>}, {pipeline_mode = #tpu.pipeline_mode<synchronous>, transform_indices = @transform_4, window_bounds = array<i64: 2, 256, 24>}, {pipeline_mode = #tpu.pipeline_mode<synchronous>, transform_indices = @transform_5, window_bounds = array<i64: 2, 24, 256>}, {transform_indices = @transform_6, window_bounds = array<i64: 1, 16, 32>}, {transform_indices = @transform_7, window_bounds = array<i64: 1, 32, 32>}, {transform_indices = @transform_8, window_bounds = array<i64: 1, 32, 32>}, {transform_indices = @transform_9, window_bounds = array<i64: 1, 32, 32>}, {transform_indices = @transform_10, window_bounds = array<i64: 1, 32, 32>}, {transform_indices = @transform_11, window_bounds = array<i64: 1, 8, 32>}, {pipeline_mode = #tpu.pipeline_mode<synchronous>, transform_indices = @transform_12, window_bounds = array<i64: 16, 32>}, {pipeline_mode = #tpu.pipeline_mode<synchronous>, transform_indices = @transform_13, window_bounds = array<i64: 32, 32>}, {pipeline_mode = #tpu.pipeline_mode<synchronous>, transform_indices = @transform_14, window_bounds = array<i64: 8, 32>}, {pipeline_mode = #tpu.pipeline_mode<synchronous>, transform_indices = @transform_15, window_bounds = array<i64: 2, 1>}]} {
    %c0 = arith.constant 0 : index
    %c0_0 = arith.constant 0 : index
    %0 = vector.load %arg16[%c0, %c0_0] : memref<8x32xf32, #tpu.memory_space<vmem>>, vector<8x32xf32>
    %c0_1 = arith.constant 0 : index
    %c0_2 = arith.constant 0 : index
    %c0_3 = arith.constant 0 : index
    %1 = vector.load %arg13[%c0_1, %c0_2, %c0_3] : memref<1x8x32xf32, #tpu.memory_space<vmem>>, vector<1x8x32xf32>
    %2 = vector.shape_cast %1 : vector<1x8x32xf32> to vector<8x32xf32>
    %c0_i32 = arith.constant 0 : i32
    %3 = arith.cmpi eq, %arg0, %c0_i32 : i32
    %c0_i32_4 = arith.constant 0 : i32
    %4 = arith.cmpi eq, %arg1, %c0_i32_4 : i32
    %5 = arith.andi %3, %4 : i1
    %6 = arith.extui %5 : i1 to i32
    %c0_i32_5 = arith.constant 0 : i32
    %7 = arith.cmpi ne, %6, %c0_i32_5 : i32
    scf.if %7 {
      %c0_38 = arith.constant 0 : index
      %c0_39 = arith.constant 0 : index
      %62 = vector.load %arg2[%c0_38, %c0_39] : memref<24x16xbf16, #tpu.memory_space<vmem>>, vector<24x16xbf16>
      %c0_40 = arith.constant 0 : index
      %c0_41 = arith.constant 0 : index
      %63 = vector.load %arg14[%c0_40, %c0_41] : memref<16x32xbf16, #tpu.memory_space<vmem>>, vector<16x32xbf16>
      %cst_42 = arith.constant dense<0.000000e+00> : vector<24x32xf32>
      %64 = tpu.matmul %62, %63, %cst_42 {dimension_numbers = #tpu.dot_dimension_numbers<[1], [0], [0], [1], [0, 0, 1, 1], [], []>} : vector<24x16xbf16>, vector<16x32xbf16>, vector<24x32xf32> -> vector<24x32xf32>
      %65 = vector.extract_strided_slice %0 {offsets = [0, 0], sizes = [1, 32], strides = [1, 1]} : vector<8x32xf32> to vector<1x32xf32>
      %66 = vector.broadcast %65 : vector<1x32xf32> to vector<24x32xf32>
      %67 = arith.addf %64, %66 : vector<24x32xf32>
      %cst_43 = arith.constant 0.000000e+00 : f32
      %68 = vector.broadcast %cst_43 : f32 to vector<24x32xf32>
      %69 = arith.maximumf %67, %68 : vector<24x32xf32>
      %c0_44 = arith.constant 0 : index
      %c0_45 = arith.constant 0 : index
      %70 = vector.load %arg18[%c0_44, %c0_45] : memref<24x32xf32, #tpu.memory_space<vmem>>, vector<24x32xf32>
      tpu.vector_store %arg18[%c0_44, %c0_45], %69 {strides = array<i32>} : memref<24x32xf32, #tpu.memory_space<vmem>>, vector<24x32xf32>,
    } else {
    }
    %c0_i32_6 = arith.constant 0 : i32
    %8 = arith.cmpi eq, %arg1, %c0_i32_6 : i32
    %9 = arith.extui %8 : i1 to i32
    %c0_i32_7 = arith.constant 0 : i32
    %10 = arith.cmpi ne, %9, %c0_i32_7 : i32
    scf.if %10 {
      %c0_38 = arith.constant 0 : index
      %c0_39 = arith.constant 0 : index
      %62 = vector.load %arg18[%c0_38, %c0_39] : memref<24x32xf32, #tpu.memory_space<vmem>>, vector<24x32xf32>
      %63 = arith.truncf %62 : vector<24x32xf32> to vector<24x32xbf16>
      %c0_40 = arith.constant 0 : index
      %c0_41 = arith.constant 0 : index
      %c0_42 = arith.constant 0 : index
      %64 = vector.load %arg10[%c0_40, %c0_41, %c0_42] : memref<1x32x32xbf16, #tpu.memory_space<vmem>>, vector<1x32x32xbf16>
      %65 = vector.shape_cast %64 : vector<1x32x32xbf16> to vector<32x32xbf16>
      %cst_43 = arith.constant dense<0.000000e+00> : vector<24x32xf32>
      %66 = tpu.matmul %63, %65, %cst_43 {dimension_numbers = #tpu.dot_dimension_numbers<[1], [0], [0], [1], [0, 0, 1, 1], [], []>} : vector<24x32xbf16>, vector<32x32xbf16>, vector<24x32xf32> -> vector<24x32xf32>
      %67 = arith.truncf %66 : vector<24x32xf32> to vector<24x32xbf16>
      %c0_44 = arith.constant 0 : index
      %c0_45 = arith.constant 0 : index
      %68 = vector.load %arg19[%c0_44, %c0_45] : memref<24x32xbf16, #tpu.memory_space<vmem>>, vector<24x32xbf16>
      tpu.vector_store %arg19[%c0_44, %c0_45], %67 {strides = array<i32>} : memref<24x32xbf16, #tpu.memory_space<vmem>>, vector<24x32xbf16>,
      %cst_46 = arith.constant 0.000000e+00 : f32
      %69 = vector.broadcast %cst_46 : f32 to vector<24x32xf32>
      %c0_47 = arith.constant 0 : index
      %c0_48 = arith.constant 0 : index
      %70 = vector.load %arg20[%c0_47, %c0_48] : memref<24x32xf32, #tpu.memory_space<vmem>>, vector<24x32xf32>
      tpu.vector_store %arg20[%c0_47, %c0_48], %69 {strides = array<i32>} : memref<24x32xf32, #tpu.memory_space<vmem>>, vector<24x32xf32>,
    } else {
    }
    %c0_8 = arith.constant 0 : index
    %c0_9 = arith.constant 0 : index
    %11 = vector.load %arg4[%c0_8, %c0_9] : memref<256x1xf32, #tpu.memory_space<vmem>>, vector<256x1xf32>
    %c0_10 = arith.constant 0 : index
    %c0_11 = arith.constant 0 : index
    %12 = vector.load %arg5[%c0_10, %c0_11] : memref<256x16xbf16, #tpu.memory_space<vmem>>, vector<256x16xbf16>
    %c0_12 = arith.constant 0 : index
    %c0_13 = arith.constant 0 : index
    %c0_14 = arith.constant 0 : index
    %13 = vector.load %arg8[%c0_12, %c0_13, %c0_14] : memref<1x16x32xbf16, #tpu.memory_space<vmem>>, vector<1x16x32xbf16>
    %14 = vector.shape_cast %13 : vector<1x16x32xbf16> to vector<16x32xbf16>
    %cst = arith.constant dense<0.000000e+00> : vector<256x32xf32>
    %15 = tpu.matmul %12, %14, %cst {dimension_numbers = #tpu.dot_dimension_numbers<[1], [0], [0], [1], [0, 0, 1, 1], [], []>} : vector<256x16xbf16>, vector<16x32xbf16>, vector<256x32xf32> -> vector<256x32xf32>
    %16 = vector.extract_strided_slice %2 {offsets = [0, 0], sizes = [1, 32], strides = [1, 1]} : vector<8x32xf32> to vector<1x32xf32>
    %17 = vector.broadcast %16 : vector<1x32xf32> to vector<256x32xf32>
    %18 = arith.addf %15, %17 : vector<256x32xf32>
    %cst_15 = arith.constant 0.000000e+00 : f32
    %19 = vector.broadcast %cst_15 : f32 to vector<256x32xf32>
    %20 = arith.maximumf %18, %19 : vector<256x32xf32>
    %21 = math.absf %18 : vector<256x32xf32>
    %cst_16 = arith.constant 0.000000e+00 : f32
    %22 = vector.broadcast %cst_16 : f32 to vector<256x32xf32>
    %23 = arith.subf %22, %21 : vector<256x32xf32>
    %24 = math.exp %23 : vector<256x32xf32>
    %cst_17 = arith.constant 1.000000e+00 : f32
    %25 = vector.broadcast %cst_17 : f32 to vector<256x32xf32>
    %26 = arith.addf %25, %24 : vector<256x32xf32>
    %27 = math.log %26 : vector<256x32xf32>
    %28 = arith.addf %20, %27 : vector<256x32xf32>
    %cst_18 = arith.constant 0.693147182 : f32
    %29 = vector.broadcast %cst_18 : f32 to vector<256x32xf32>
    %30 = arith.subf %28, %29 : vector<256x32xf32>
    %31 = arith.truncf %30 : vector<256x32xf32> to vector<256x32xbf16>
    %c0_19 = arith.constant 0 : index
    %c0_20 = arith.constant 0 : index
    %c0_21 = arith.constant 0 : index
    %32 = vector.load %arg9[%c0_19, %c0_20, %c0_21] : memref<1x32x32xbf16, #tpu.memory_space<vmem>>, vector<1x32x32xbf16>
    %33 = vector.shape_cast %32 : vector<1x32x32xbf16> to vector<32x32xbf16>
    %cst_22 = arith.constant dense<0.000000e+00> : vector<256x32xf32>
    %34 = tpu.matmul %31, %33, %cst_22 {dimension_numbers = #tpu.dot_dimension_numbers<[1], [0], [0], [1], [0, 0, 1, 1], [], []>} : vector<256x32xbf16>, vector<32x32xbf16>, vector<256x32xf32> -> vector<256x32xf32>
    %35 = vector.extract_strided_slice %2 {offsets = [1, 0], sizes = [1, 32], strides = [1, 1]} : vector<8x32xf32> to vector<1x32xf32>
    %36 = vector.broadcast %35 : vector<1x32xf32> to vector<256x32xf32>
    %37 = arith.addf %34, %36 : vector<256x32xf32>
    %38 = vector.broadcast %11 : vector<256x1xf32> to vector<256x32xf32>
    %39 = arith.mulf %37, %38 : vector<256x32xf32>
    %40 = arith.index_cast %arg1 : i32 to index
    %c0_23 = arith.constant 0 : index
    %c0_24 = arith.constant 0 : index
    %41 = vector.load %arg6[%40, %c0_23, %c0_24] : memref<2x256x24xbf16, #tpu.memory_space<vmem>>, vector<1x256x24xbf16>
    %42 = vector.shape_cast %41 : vector<1x256x24xbf16> to vector<256x24xbf16>
    %43 = arith.index_cast %arg1 : i32 to index
    %c0_25 = arith.constant 0 : index
    %c0_26 = arith.constant 0 : index
    %44 = vector.load %arg7[%43, %c0_25, %c0_26] : memref<2x24x256xbf16, #tpu.memory_space<vmem>>, vector<1x24x256xbf16>
    %45 = vector.shape_cast %44 : vector<1x24x256xbf16> to vector<24x256xbf16>
    %c0_27 = arith.constant 0 : index
    %c0_28 = arith.constant 0 : index
    %46 = vector.load %arg19[%c0_27, %c0_28] : memref<24x32xbf16, #tpu.memory_space<vmem>>, vector<24x32xbf16>
    %cst_29 = arith.constant dense<0.000000e+00> : vector<256x32xf32>
    %47 = tpu.matmul %42, %46, %cst_29 {dimension_numbers = #tpu.dot_dimension_numbers<[1], [0], [0], [1], [0, 0, 1, 1], [], []>} : vector<256x24xbf16>, vector<24x32xbf16>, vector<256x32xf32> -> vector<256x32xf32>
    %48 = arith.mulf %47, %39 : vector<256x32xf32>
    %49 = arith.truncf %48 : vector<256x32xf32> to vector<256x32xbf16>
    %c0_30 = arith.constant 0 : index
    %c0_31 = arith.constant 0 : index
    %50 = vector.load %arg20[%c0_30, %c0_31] : memref<24x32xf32, #tpu.memory_space<vmem>>, vector<24x32xf32>
    %cst_32 = arith.constant dense<0.000000e+00> : vector<24x32xf32>
    %51 = tpu.matmul %45, %49, %cst_32 {dimension_numbers = #tpu.dot_dimension_numbers<[1], [0], [0], [1], [0, 0, 1, 1], [], []>} : vector<24x256xbf16>, vector<256x32xbf16>, vector<24x32xf32> -> vector<24x32xf32>
    %52 = arith.addf %50, %51 : vector<24x32xf32>
    %c0_33 = arith.constant 0 : index
    %c0_34 = arith.constant 0 : index
    %53 = vector.load %arg20[%c0_33, %c0_34] : memref<24x32xf32, #tpu.memory_space<vmem>>, vector<24x32xf32>
    tpu.vector_store %arg20[%c0_33, %c0_34], %52 {strides = array<i32>} : memref<24x32xf32, #tpu.memory_space<vmem>>, vector<24x32xf32>,
    %c1_i32 = arith.constant 1 : i32
    %54 = arith.cmpi eq, %arg1, %c1_i32 : i32
    %55 = arith.extui %54 : i1 to i32
    %c0_i32_35 = arith.constant 0 : i32
    %56 = arith.cmpi ne, %55, %c0_i32_35 : i32
    scf.if %56 {
      %c0_38 = arith.constant 0 : index
      %c0_39 = arith.constant 0 : index
      %62 = vector.load %arg20[%c0_38, %c0_39] : memref<24x32xf32, #tpu.memory_space<vmem>>, vector<24x32xf32>
      %63 = arith.truncf %62 : vector<24x32xf32> to vector<24x32xbf16>
      %c0_40 = arith.constant 0 : index
      %c0_41 = arith.constant 0 : index
      %c0_42 = arith.constant 0 : index
      %64 = vector.load %arg11[%c0_40, %c0_41, %c0_42] : memref<1x32x32xbf16, #tpu.memory_space<vmem>>, vector<1x32x32xbf16>
      %65 = vector.shape_cast %64 : vector<1x32x32xbf16> to vector<32x32xbf16>
      %cst_43 = arith.constant dense<0.000000e+00> : vector<24x32xf32>
      %66 = tpu.matmul %63, %65, %cst_43 {dimension_numbers = #tpu.dot_dimension_numbers<[1], [0], [0], [1], [0, 0, 1, 1], [], []>} : vector<24x32xbf16>, vector<32x32xbf16>, vector<24x32xf32> -> vector<24x32xf32>
      %67 = vector.extract_strided_slice %2 {offsets = [2, 0], sizes = [1, 32], strides = [1, 1]} : vector<8x32xf32> to vector<1x32xf32>
      %68 = vector.broadcast %67 : vector<1x32xf32> to vector<24x32xf32>
      %69 = arith.addf %66, %68 : vector<24x32xf32>
      %cst_44 = arith.constant 0.000000e+00 : f32
      %70 = vector.broadcast %cst_44 : f32 to vector<24x32xf32>
      %71 = arith.maximumf %69, %70 : vector<24x32xf32>
      %72 = math.absf %69 : vector<24x32xf32>
      %cst_45 = arith.constant 0.000000e+00 : f32
      %73 = vector.broadcast %cst_45 : f32 to vector<24x32xf32>
      %74 = arith.subf %73, %72 : vector<24x32xf32>
      %75 = math.exp %74 : vector<24x32xf32>
      %cst_46 = arith.constant 1.000000e+00 : f32
      %76 = vector.broadcast %cst_46 : f32 to vector<24x32xf32>
      %77 = arith.addf %76, %75 : vector<24x32xf32>
      %78 = math.log %77 : vector<24x32xf32>
      %79 = arith.addf %71, %78 : vector<24x32xf32>
      %cst_47 = arith.constant 0.693147182 : f32
      %80 = vector.broadcast %cst_47 : f32 to vector<24x32xf32>
      %81 = arith.subf %79, %80 : vector<24x32xf32>
      %82 = arith.truncf %81 : vector<24x32xf32> to vector<24x32xbf16>
      %c0_48 = arith.constant 0 : index
      %c0_49 = arith.constant 0 : index
      %c0_50 = arith.constant 0 : index
      %83 = vector.load %arg12[%c0_48, %c0_49, %c0_50] : memref<1x32x32xbf16, #tpu.memory_space<vmem>>, vector<1x32x32xbf16>
      %84 = vector.shape_cast %83 : vector<1x32x32xbf16> to vector<32x32xbf16>
      %cst_51 = arith.constant dense<0.000000e+00> : vector<24x32xf32>
      %85 = tpu.matmul %82, %84, %cst_51 {dimension_numbers = #tpu.dot_dimension_numbers<[1], [0], [0], [1], [0, 0, 1, 1], [], []>} : vector<24x32xbf16>, vector<32x32xbf16>, vector<24x32xf32> -> vector<24x32xf32>
      %86 = vector.extract_strided_slice %2 {offsets = [3, 0], sizes = [1, 32], strides = [1, 1]} : vector<8x32xf32> to vector<1x32xf32>
      %87 = vector.broadcast %86 : vector<1x32xf32> to vector<24x32xf32>
      %88 = arith.addf %85, %87 : vector<24x32xf32>
      %c0_52 = arith.constant 0 : index
      %c0_53 = arith.constant 0 : index
      %89 = vector.load %arg18[%c0_52, %c0_53] : memref<24x32xf32, #tpu.memory_space<vmem>>, vector<24x32xf32>
      %90 = arith.addf %89, %88 : vector<24x32xf32>
      %91 = vector.extract_strided_slice %2 {offsets = [4, 0], sizes = [1, 32], strides = [1, 1]} : vector<8x32xf32> to vector<1x32xf32>
      %92 = vector.broadcast %91 : vector<1x32xf32> to vector<24x32xf32>
      %93 = arith.mulf %90, %92 : vector<24x32xf32>
      %94 = vector.extract_strided_slice %2 {offsets = [5, 0], sizes = [1, 32], strides = [1, 1]} : vector<8x32xf32> to vector<1x32xf32>
      %95 = vector.broadcast %94 : vector<1x32xf32> to vector<24x32xf32>
      %96 = arith.addf %93, %95 : vector<24x32xf32>
      %c0_54 = arith.constant 0 : index
      %c0_55 = arith.constant 0 : index
      %97 = vector.load %arg18[%c0_54, %c0_55] : memref<24x32xf32, #tpu.memory_space<vmem>>, vector<24x32xf32>
      tpu.vector_store %arg18[%c0_54, %c0_55], %96 {strides = array<i32>} : memref<24x32xf32, #tpu.memory_space<vmem>>, vector<24x32xf32>,
    } else {
    }
    %c2_i32 = arith.constant 2 : i32
    %57 = arith.cmpi eq, %arg0, %c2_i32 : i32
    %c1_i32_36 = arith.constant 1 : i32
    %58 = arith.cmpi eq, %arg1, %c1_i32_36 : i32
    %59 = arith.andi %57, %58 : i1
    %60 = arith.extui %59 : i1 to i32
    %c0_i32_37 = arith.constant 0 : i32
    %61 = arith.cmpi ne, %60, %c0_i32_37 : i32
    scf.if %61 {
      %c0_38 = arith.constant 0 : index
      %c0_39 = arith.constant 0 : index
      %62 = vector.load %arg18[%c0_38, %c0_39] : memref<24x32xf32, #tpu.memory_space<vmem>>, vector<24x32xf32>
      %c0_40 = arith.constant 0 : index
      %c0_41 = arith.constant 0 : index
      %63 = vector.load %arg3[%c0_40, %c0_41] : memref<2x24xf32, #tpu.memory_space<vmem>>, vector<2x24xf32>
      %cst_42 = arith.constant dense<0.000000e+00> : vector<2x32xf32>
      %64 = tpu.matmul %63, %62, %cst_42 {dimension_numbers = #tpu.dot_dimension_numbers<[1], [0], [0], [1], [0, 0, 1, 1], [], []>} : vector<2x24xf32>, vector<24x32xf32>, vector<2x32xf32> -> vector<2x32xf32>
      %65 = arith.truncf %64 : vector<2x32xf32> to vector<2x32xbf16>
      %c0_43 = arith.constant 0 : index
      %c0_44 = arith.constant 0 : index
      %66 = vector.load %arg15[%c0_43, %c0_44] : memref<32x32xbf16, #tpu.memory_space<vmem>>, vector<32x32xbf16>
      %cst_45 = arith.constant dense<0.000000e+00> : vector<2x32xf32>
      %67 = tpu.matmul %65, %66, %cst_45 {dimension_numbers = #tpu.dot_dimension_numbers<[1], [0], [0], [1], [0, 0, 1, 1], [], []>} : vector<2x32xbf16>, vector<32x32xbf16>, vector<2x32xf32> -> vector<2x32xf32>
      %68 = vector.extract_strided_slice %0 {offsets = [1, 0], sizes = [1, 32], strides = [1, 1]} : vector<8x32xf32> to vector<1x32xf32>
      %69 = vector.broadcast %68 : vector<1x32xf32> to vector<2x32xf32>
      %70 = arith.addf %67, %69 : vector<2x32xf32>
      %cst_46 = arith.constant 0.000000e+00 : f32
      %71 = vector.broadcast %cst_46 : f32 to vector<2x32xf32>
      %72 = arith.maximumf %70, %71 : vector<2x32xf32>
      %73 = vector.extract_strided_slice %0 {offsets = [2, 0], sizes = [1, 32], strides = [1, 1]} : vector<8x32xf32> to vector<1x32xf32>
      %74 = vector.broadcast %73 : vector<1x32xf32> to vector<2x32xf32>
      %75 = arith.mulf %72, %74 : vector<2x32xf32>
      %cst_47 = arith.constant dense<0.000000e+00> : vector<2xf32>
      %76 = vector.multi_reduction <add>, %75, %cst_47 [1] : vector<2x32xf32> to vector<2xf32>
      %77 = vector.shape_cast %76 : vector<2xf32> to vector<2x1xf32>
      %78 = vector.extract_strided_slice %0 {offsets = [3, 0], sizes = [1, 1], strides = [1, 1]} : vector<8x32xf32> to vector<1x1xf32>
      %79 = vector.broadcast %78 : vector<1x1xf32> to vector<2x1xf32>
      %80 = arith.addf %77, %79 : vector<2x1xf32>
      %c0_48 = arith.constant 0 : index
      %c0_49 = arith.constant 0 : index
      %81 = vector.load %arg17[%c0_48, %c0_49] : memref<2x1xf32, #tpu.memory_space<vmem>>, vector<2x1xf32>
      tpu.vector_store %arg17[%c0_48, %c0_49], %80 {strides = array<i32>} : memref<2x1xf32, #tpu.memory_space<vmem>>, vector<2x1xf32>,
    } else {
    }
    return
  }
  func.func @transform_0(%arg0: i32, %arg1: i32) -> (i32, i32) {
    %c0_i32 = arith.constant 0 : i32
    %c0_i32_0 = arith.constant 0 : i32
    %c0_i32_1 = arith.constant 0 : i32
    return %c0_i32, %c0_i32_0 : i32, i32
  }
  func.func @transform_1(%arg0: i32, %arg1: i32) -> (i32, i32) {
    %c0_i32 = arith.constant 0 : i32
    %c0_i32_0 = arith.constant 0 : i32
    %c0_i32_1 = arith.constant 0 : i32
    return %c0_i32, %c0_i32_0 : i32, i32
  }
  func.func @transform_2(%arg0: i32, %arg1: i32) -> (i32, i32) {
    %c0_i32 = arith.constant 0 : i32
    %c0_i32_0 = arith.constant 0 : i32
    return %arg1, %c0_i32 : i32, i32
  }
  func.func @transform_3(%arg0: i32, %arg1: i32) -> (i32, i32) {
    %c0_i32 = arith.constant 0 : i32
    %c0_i32_0 = arith.constant 0 : i32
    return %arg1, %c0_i32 : i32, i32
  }
  func.func @transform_4(%arg0: i32, %arg1: i32) -> (i32, i32, i32) {
    %c0_i32 = arith.constant 0 : i32
    %c0_i32_0 = arith.constant 0 : i32
    %c0_i32_1 = arith.constant 0 : i32
    %c0_i32_2 = arith.constant 0 : i32
    return %c0_i32, %c0_i32_0, %c0_i32_1 : i32, i32, i32
  }
  func.func @transform_5(%arg0: i32, %arg1: i32) -> (i32, i32, i32) {
    %c0_i32 = arith.constant 0 : i32
    %c0_i32_0 = arith.constant 0 : i32
    %c0_i32_1 = arith.constant 0 : i32
    %c0_i32_2 = arith.constant 0 : i32
    return %c0_i32, %c0_i32_0, %c0_i32_1 : i32, i32, i32
  }
  func.func @transform_6(%arg0: i32, %arg1: i32) -> (i32, i32, i32) {
    %c0_i32 = arith.constant 0 : i32
    %c0_i32_0 = arith.constant 0 : i32
    %c0_i32_1 = arith.constant 0 : i32
    return %arg0, %c0_i32, %c0_i32_0 : i32, i32, i32
  }
  func.func @transform_7(%arg0: i32, %arg1: i32) -> (i32, i32, i32) {
    %c0_i32 = arith.constant 0 : i32
    %c0_i32_0 = arith.constant 0 : i32
    %c0_i32_1 = arith.constant 0 : i32
    return %arg0, %c0_i32, %c0_i32_0 : i32, i32, i32
  }
  func.func @transform_8(%arg0: i32, %arg1: i32) -> (i32, i32, i32) {
    %c0_i32 = arith.constant 0 : i32
    %c0_i32_0 = arith.constant 0 : i32
    %c0_i32_1 = arith.constant 0 : i32
    return %arg0, %c0_i32, %c0_i32_0 : i32, i32, i32
  }
  func.func @transform_9(%arg0: i32, %arg1: i32) -> (i32, i32, i32) {
    %c0_i32 = arith.constant 0 : i32
    %c0_i32_0 = arith.constant 0 : i32
    %c0_i32_1 = arith.constant 0 : i32
    return %arg0, %c0_i32, %c0_i32_0 : i32, i32, i32
  }
  func.func @transform_10(%arg0: i32, %arg1: i32) -> (i32, i32, i32) {
    %c0_i32 = arith.constant 0 : i32
    %c0_i32_0 = arith.constant 0 : i32
    %c0_i32_1 = arith.constant 0 : i32
    return %arg0, %c0_i32, %c0_i32_0 : i32, i32, i32
  }
  func.func @transform_11(%arg0: i32, %arg1: i32) -> (i32, i32, i32) {
    %c0_i32 = arith.constant 0 : i32
    %c0_i32_0 = arith.constant 0 : i32
    %c0_i32_1 = arith.constant 0 : i32
    return %arg0, %c0_i32, %c0_i32_0 : i32, i32, i32
  }
  func.func @transform_12(%arg0: i32, %arg1: i32) -> (i32, i32) {
    %c0_i32 = arith.constant 0 : i32
    %c0_i32_0 = arith.constant 0 : i32
    %c0_i32_1 = arith.constant 0 : i32
    return %c0_i32, %c0_i32_0 : i32, i32
  }
  func.func @transform_13(%arg0: i32, %arg1: i32) -> (i32, i32) {
    %c0_i32 = arith.constant 0 : i32
    %c0_i32_0 = arith.constant 0 : i32
    %c0_i32_1 = arith.constant 0 : i32
    return %c0_i32, %c0_i32_0 : i32, i32
  }
  func.func @transform_14(%arg0: i32, %arg1: i32) -> (i32, i32) {
    %c0_i32 = arith.constant 0 : i32
    %c0_i32_0 = arith.constant 0 : i32
    %c0_i32_1 = arith.constant 0 : i32
    return %c0_i32, %c0_i32_0 : i32, i32
  }
  func.func @transform_15(%arg0: i32, %arg1: i32) -> (i32, i32) {
    %c0_i32 = arith.constant 0 : i32
    %c0_i32_0 = arith.constant 0 : i32
    %c0_i32_1 = arith.constant 0 : i32
    return %c0_i32, %c0_i32_0 : i32, i32
  }
}

</mosaic_0001>

<llo_original>
// kernel: tpu_custom_call.1
$region0: #{tpu_custom_call.1}
  #allocation0 [shape = 'u32[]', space=smem, size = 0x4, offset = 0x4, fixed_abs, tag = 'smem constant byte address 0x4 - core index']
  #allocation1 [shape = 'u32[144,128]{1,0:T(1,128)}', space=vmem, size = 0x12000, scoped, tag = 'internal scratch']
  #allocation2 [shape = 'f32[24,32]{1,0:T(8,128)}', space=vmem, size = 0x3000, scoped, tag = 'scratch operand']
  #allocation3 [shape = 'bf16[24,32]{1,0:T(8,128)(2,1)}', space=vmem, size = 0x1800, scoped, tag = 'scratch operand']
  #allocation4 [shape = 'f32[24,32]{1,0:T(8,128)}', space=vmem, size = 0x3000, scoped, tag = 'scratch operand']
  %s0 = inlined_call_operand.vmem [shape: bf16[24,16], index: 0, kind: input, shape index: {}]
  %s1 = inlined_call_operand.vmem [shape: f32[2,24], index: 1, kind: input, shape index: {}]
  %s2 = inlined_call_operand.vmem [shape: f32[512,1], index: 2, kind: input, shape index: {}]
  %s3 = inlined_call_operand.vmem [shape: bf16[512,16], index: 3, kind: input, shape index: {}]
  %s4 = inlined_call_operand.vmem [shape: bf16[2,256,24], index: 4, kind: input, shape index: {}]
  %s5 = inlined_call_operand.vmem [shape: bf16[2,24,256], index: 5, kind: input, shape index: {}]
  %s6 = inlined_call_operand.vmem [shape: bf16[3,16,32], index: 6, kind: input, shape index: {}]
  %s7 = inlined_call_operand.vmem [shape: bf16[3,32,32], index: 7, kind: input, shape index: {}]
  %s8 = inlined_call_operand.vmem [shape: bf16[3,32,32], index: 8, kind: input, shape index: {}]
  %s9 = inlined_call_operand.vmem [shape: bf16[3,32,32], index: 9, kind: input, shape index: {}]
  %s10 = inlined_call_operand.vmem [shape: bf16[3,32,32], index: 10, kind: input, shape index: {}]
  %s11 = inlined_call_operand.vmem [shape: f32[3,8,32], index: 11, kind: input, shape index: {}]
  %s12 = inlined_call_operand.vmem [shape: bf16[16,32], index: 12, kind: input, shape index: {}]
  %s13 = inlined_call_operand.vmem [shape: bf16[32,32], index: 13, kind: input, shape index: {}]
  %s14 = inlined_call_operand.vmem [shape: f32[8,32], index: 14, kind: input, shape index: {}]
  %s15 = inlined_call_operand.vmem [shape: f32[2,1], index: 15, kind: output, shape index: {}]
  %s16 = sld [smem:[#allocation0]]
  $region109: #{tpu_custom_call.1} parent=0
    _
  %s18 = ssub.s32 1, %s16
  %s19 = scalar_select 0, %s18, %s16
  loop: start=0, step=1, limit=8
  $region2: #{tpu_custom_call.1} parent=0 // loop_pre_header
    _
  $region3: #{tpu_custom_call.1} parent=0 // loop_header
    %s21 = sphi 0, %s25
    %p22 = scmp.ge.s32.totalorder %s21, 8
    %s28 = sphi 0, %s40
    %s29 = sphi 0, %s36
    %s30 = sphi 0, %s28
    %s31 = sphi 0, %s29
    %s32 = sphi 0, %s30
    %s33 = sphi 0, %s31
    %s41 = sphi 0, %s41
    %s43 = sphi 0, %s41
    %s44 = sphi 0, %s43
    %s58 = sphi 0, %s44
    %s62 = sphi 0, %s62
    %s64 = sphi 0, %s62
    %s65 = sphi 0, %s64
    %s79 = sphi 0, %s65
    %s85 = sphi 0, %s87
    %s88 = sphi 0, %s85
    %s89 = sphi 0, %s88
    %s105 = sphi 0, %s89
    %s111 = sphi 0, %s113
    %s114 = sphi 0, %s111
    %s115 = sphi 0, %s114
    %s131 = sphi 0, %s115
    %s135 = sphi 0, %s135
    %s137 = sphi 0, %s135
    %s138 = sphi 0, %s137
    %s152 = sphi 0, %s138
    %s156 = sphi 0, %s156
    %s158 = sphi 0, %s156
    %s159 = sphi 0, %s158
    %s173 = sphi 0, %s159
    %s179 = sphi 0, %s181
    %s182 = sphi 0, %s179
    %s183 = sphi 0, %s182
    %s199 = sphi 0, %s183
    %s205 = sphi 0, %s207
    %s208 = sphi 0, %s205
    %s209 = sphi 0, %s208
    %s225 = sphi 0, %s209
    %s231 = sphi 0, %s233
    %s234 = sphi 0, %s231
    %s235 = sphi 0, %s234
    %s251 = sphi 0, %s235
    %s257 = sphi 0, %s259
    %s260 = sphi 0, %s257
    %s261 = sphi 0, %s260
    %s277 = sphi 0, %s261
    %s283 = sphi 0, %s285
    %s286 = sphi 0, %s283
    %s287 = sphi 0, %s286
    %s303 = sphi 0, %s287
    %s309 = sphi 0, %s311
    %s312 = sphi 0, %s309
    %s313 = sphi 0, %s312
    %s329 = sphi 0, %s313
    %s333 = sphi 0, %s333
    %s335 = sphi 0, %s333
    %s336 = sphi 0, %s335
    %s350 = sphi 0, %s336
    %s354 = sphi 0, %s354
    %s356 = sphi 0, %s354
    %s357 = sphi 0, %s356
    %s371 = sphi 0, %s357
    %s375 = sphi 0, %s375
    %s377 = sphi 0, %s375
    %s378 = sphi 0, %s377
    %s392 = sphi 0, %s378
    %s396 = sphi 0, %s396
    %s398 = sphi 0, %s396
    %s399 = sphi 0, %s398
    %s413 = sphi 0, %s399
  $region4: #{tpu_custom_call.1} parent=0 // loop_header_branch
    %24 = sbr.rel (%p22) target = $region8
  $region5: #{tpu_custom_call.1} parent=0 // loop_body
    %s26 = ssub.s32 %s21, 1
    %s27 = ssub.s32 %s21, 2
    %s34 = sadd.s32 1, %s29
    %p35 = scmp.ge.s32.totalorder %s34, 2
    %s36 = scalar_select %p35, 0, %s34
    %s37 = sadd.s32 1, %s28
    %s38 = scalar_select %p35, %s37, %s28
    %p39 = scmp.ge.s32.totalorder %s38, 3
    %s40 = scalar_select %p39, 0, %s38
    %s42 = sadd.s32 %s41, 1
    %p45 = scmp.eq.s32.totalorder %s21, 5
    %p46 = scmp.ne.s32.totalorder %s41, %s43
    %p47 = scmp.eq.s32.totalorder %s21, 0
    %p48 = por %p46, %p47
    %p49 = scmp.ne.s32.totalorder %s41, %s43
    %p50 = scmp.eq.s32.totalorder %s26, 5
    %p51 = por %p49, %p50
    %p52 = scmp.ne.s32.totalorder %s43, %s44
    %p53 = scmp.eq.s32.totalorder %s26, 0
    %p54 = por %p52, %p53
    %p55 = scmp.ne.s32.totalorder %s43, %s44
    %p56 = scmp.eq.s32.totalorder %s27, 5
    %p57 = por %p55, %p56
    %p59 = scmp.ne.s32.totalorder %s44, %s58
    %p60 = scmp.eq.s32.totalorder %s27, 0
    %p61 = por %p59, %p60
    %s63 = sadd.s32 %s62, 1
    %p66 = scmp.eq.s32.totalorder %s21, 5
    %p67 = scmp.ne.s32.totalorder %s62, %s64
    %p68 = scmp.eq.s32.totalorder %s21, 0
    %p69 = por %p67, %p68
    %p70 = scmp.ne.s32.totalorder %s62, %s64
    %p71 = scmp.eq.s32.totalorder %s26, 5
    %p72 = por %p70, %p71
    %p73 = scmp.ne.s32.totalorder %s64, %s65
    %p74 = scmp.eq.s32.totalorder %s26, 0
    %p75 = por %p73, %p74
    %p76 = scmp.ne.s32.totalorder %s64, %s65
    %p77 = scmp.eq.s32.totalorder %s27, 5
    %p78 = por %p76, %p77
    %p80 = scmp.ne.s32.totalorder %s65, %s79
    %p81 = scmp.eq.s32.totalorder %s27, 0
    %p82 = por %p80, %p81
    %s83 = ssub.s32 %s29, %s36
    %p84 = scmp.eq.s32.totalorder %s83, 0
    %s86 = sadd.s32 %s85, 1
    %s87 = scalar_select %p84, %s85, %s86
    %p90 = pneg %p84
    %p91 = scmp.eq.s32.totalorder %s21, 5
    %p92 = por %p90, %p91
    %p93 = scmp.ne.s32.totalorder %s85, %s88
    %p94 = scmp.eq.s32.totalorder %s21, 0
    %p95 = por %p93, %p94
    %p96 = scmp.ne.s32.totalorder %s85, %s88
    %p97 = scmp.eq.s32.totalorder %s26, 5
    %p98 = por %p96, %p97
    %p99 = scmp.ne.s32.totalorder %s88, %s89
    %p100 = scmp.eq.s32.totalorder %s26, 0
    %p101 = por %p99, %p100
    %p102 = scmp.ne.s32.totalorder %s88, %s89
    %p103 = scmp.eq.s32.totalorder %s27, 5
    %p104 = por %p102, %p103
    %p106 = scmp.ne.s32.totalorder %s89, %s105
    %p107 = scmp.eq.s32.totalorder %s27, 0
    %p108 = por %p106, %p107
    %s109 = ssub.s32 %s29, %s36
    %p110 = scmp.eq.s32.totalorder %s109, 0
    %s112 = sadd.s32 %s111, 1
    %s113 = scalar_select %p110, %s111, %s112
    %p116 = pneg %p110
    %p117 = scmp.eq.s32.totalorder %s21, 5
    %p118 = por %p116, %p117
    %p119 = scmp.ne.s32.totalorder %s111, %s114
    %p120 = scmp.eq.s32.totalorder %s21, 0
    %p121 = por %p119, %p120
    %p122 = scmp.ne.s32.totalorder %s111, %s114
    %p123 = scmp.eq.s32.totalorder %s26, 5
    %p124 = por %p122, %p123
    %p125 = scmp.ne.s32.totalorder %s114, %s115
    %p126 = scmp.eq.s32.totalorder %s26, 0
    %p127 = por %p125, %p126
    %p128 = scmp.ne.s32.totalorder %s114, %s115
    %p129 = scmp.eq.s32.totalorder %s27, 5
    %p130 = por %p128, %p129
    %p132 = scmp.ne.s32.totalorder %s115, %s131
    %p133 = scmp.eq.s32.totalorder %s27, 0
    %p134 = por %p132, %p133
    %s136 = sadd.s32 %s135, 1
    %p139 = scmp.eq.s32.totalorder %s21, 5
    %p140 = scmp.ne.s32.totalorder %s135, %s137
    %p141 = scmp.eq.s32.totalorder %s21, 0
    %p142 = por %p140, %p141
    %p143 = scmp.ne.s32.totalorder %s135, %s137
    %p144 = scmp.eq.s32.totalorder %s26, 5
    %p145 = por %p143, %p144
    %p146 = scmp.ne.s32.totalorder %s137, %s138
    %p147 = scmp.eq.s32.totalorder %s26, 0
    %p148 = por %p146, %p147
    %p149 = scmp.ne.s32.totalorder %s137, %s138
    %p150 = scmp.eq.s32.totalorder %s27, 5
    %p151 = por %p149, %p150
    %p153 = scmp.ne.s32.totalorder %s138, %s152
    %p154 = scmp.eq.s32.totalorder %s27, 0
    %p155 = por %p153, %p154
    %s157 = sadd.s32 %s156, 1
    %p160 = scmp.eq.s32.totalorder %s21, 5
    %p161 = scmp.ne.s32.totalorder %s156, %s158
    %p162 = scmp.eq.s32.totalorder %s21, 0
    %p163 = por %p161, %p162
    %p164 = scmp.ne.s32.totalorder %s156, %s158
    %p165 = scmp.eq.s32.totalorder %s26, 5
    %p166 = por %p164, %p165
    %p167 = scmp.ne.s32.totalorder %s158, %s159
    %p168 = scmp.eq.s32.totalorder %s26, 0
    %p169 = por %p167, %p168
    %p170 = scmp.ne.s32.totalorder %s158, %s159
    %p171 = scmp.eq.s32.totalorder %s27, 5
    %p172 = por %p170, %p171
    %p174 = scmp.ne.s32.totalorder %s159, %s173
    %p175 = scmp.eq.s32.totalorder %s27, 0
    %p176 = por %p174, %p175
    %s177 = ssub.s32 %s28, %s40
    %p178 = scmp.eq.s32.totalorder %s177, 0
    %s180 = sadd.s32 %s179, 1
    %s181 = scalar_select %p178, %s179, %s180
    %p184 = pneg %p178
    %p185 = scmp.eq.s32.totalorder %s21, 5
    %p186 = por %p184, %p185
    %p187 = scmp.ne.s32.totalorder %s179, %s182
    %p188 = scmp.eq.s32.totalorder %s21, 0
    %p189 = por %p187, %p188
    %p190 = scmp.ne.s32.totalorder %s179, %s182
    %p191 = scmp.eq.s32.totalorder %s26, 5
    %p192 = por %p190, %p191
    %p193 = scmp.ne.s32.totalorder %s182, %s183
    %p194 = scmp.eq.s32.totalorder %s26, 0
    %p195 = por %p193, %p194
    %p196 = scmp.ne.s32.totalorder %s182, %s183
    %p197 = scmp.eq.s32.totalorder %s27, 5
    %p198 = por %p196, %p197
    %p200 = scmp.ne.s32.totalorder %s183, %s199
    %p201 = scmp.eq.s32.totalorder %s27, 0
    %p202 = por %p200, %p201
    %s203 = ssub.s32 %s28, %s40
    %p204 = scmp.eq.s32.totalorder %s203, 0
    %s206 = sadd.s32 %s205, 1
    %s207 = scalar_select %p204, %s205, %s206
    %p210 = pneg %p204
    %p211 = scmp.eq.s32.totalorder %s21, 5
    %p212 = por %p210, %p211
    %p213 = scmp.ne.s32.totalorder %s205, %s208
    %p214 = scmp.eq.s32.totalorder %s21, 0
    %p215 = por %p213, %p214
    %p216 = scmp.ne.s32.totalorder %s205, %s208
    %p217 = scmp.eq.s32.totalorder %s26, 5
    %p218 = por %p216, %p217
    %p219 = scmp.ne.s32.totalorder %s208, %s209
    %p220 = scmp.eq.s32.totalorder %s26, 0
    %p221 = por %p219, %p220
    %p222 = scmp.ne.s32.totalorder %s208, %s209
    %p223 = scmp.eq.s32.totalorder %s27, 5
    %p224 = por %p222, %p223
    %p226 = scmp.ne.s32.totalorder %s209, %s225
    %p227 = scmp.eq.s32.totalorder %s27, 0
    %p228 = por %p226, %p227
    %s229 = ssub.s32 %s28, %s40
    %p230 = scmp.eq.s32.totalorder %s229, 0
    %s232 = sadd.s32 %s231, 1
    %s233 = scalar_select %p230, %s231, %s232
    %p236 = pneg %p230
    %p237 = scmp.eq.s32.totalorder %s21, 5
    %p238 = por %p236, %p237
    %p239 = scmp.ne.s32.totalorder %s231, %s234
    %p240 = scmp.eq.s32.totalorder %s21, 0
    %p241 = por %p239, %p240
    %p242 = scmp.ne.s32.totalorder %s231, %s234
    %p243 = scmp.eq.s32.totalorder %s26, 5
    %p244 = por %p242, %p243
    %p245 = scmp.ne.s32.totalorder %s234, %s235
    %p246 = scmp.eq.s32.totalorder %s26, 0
    %p247 = por %p245, %p246
    %p248 = scmp.ne.s32.totalorder %s234, %s235
    %p249 = scmp.eq.s32.totalorder %s27, 5
    %p250 = por %p248, %p249
    %p252 = scmp.ne.s32.totalorder %s235, %s251
    %p253 = scmp.eq.s32.totalorder %s27, 0
    %p254 = por %p252, %p253
    %s255 = ssub.s32 %s28, %s40
    %p256 = scmp.eq.s32.totalorder %s255, 0
    %s258 = sadd.s32 %s257, 1
    %s259 = scalar_select %p256, %s257, %s258
    %p262 = pneg %p256
    %p263 = scmp.eq.s32.totalorder %s21, 5
    %p264 = por %p262, %p263
    %p265 = scmp.ne.s32.totalorder %s257, %s260
    %p266 = scmp.eq.s32.totalorder %s21, 0
    %p267 = por %p265, %p266
    %p268 = scmp.ne.s32.totalorder %s257, %s260
    %p269 = scmp.eq.s32.totalorder %s26, 5
    %p270 = por %p268, %p269
    %p271 = scmp.ne.s32.totalorder %s260, %s261
    %p272 = scmp.eq.s32.totalorder %s26, 0
    %p273 = por %p271, %p272
    %p274 = scmp.ne.s32.totalorder %s260, %s261
    %p275 = scmp.eq.s32.totalorder %s27, 5
    %p276 = por %p274, %p275
    %p278 = scmp.ne.s32.totalorder %s261, %s277
    %p279 = scmp.eq.s32.totalorder %s27, 0
    %p280 = por %p278, %p279
    %s281 = ssub.s32 %s28, %s40
    %p282 = scmp.eq.s32.totalorder %s281, 0
    %s284 = sadd.s32 %s283, 1
    %s285 = scalar_select %p282, %s283, %s284
    %p288 = pneg %p282
    %p289 = scmp.eq.s32.totalorder %s21, 5
    %p290 = por %p288, %p289
    %p291 = scmp.ne.s32.totalorder %s283, %s286
    %p292 = scmp.eq.s32.totalorder %s21, 0
    %p293 = por %p291, %p292
    %p294 = scmp.ne.s32.totalorder %s283, %s286
    %p295 = scmp.eq.s32.totalorder %s26, 5
    %p296 = por %p294, %p295
    %p297 = scmp.ne.s32.totalorder %s286, %s287
    %p298 = scmp.eq.s32.totalorder %s26, 0
    %p299 = por %p297, %p298
    %p300 = scmp.ne.s32.totalorder %s286, %s287
    %p301 = scmp.eq.s32.totalorder %s27, 5
    %p302 = por %p300, %p301
    %p304 = scmp.ne.s32.totalorder %s287, %s303
    %p305 = scmp.eq.s32.totalorder %s27, 0
    %p306 = por %p304, %p305
    %s307 = ssub.s32 %s28, %s40
    %p308 = scmp.eq.s32.totalorder %s307, 0
    %s310 = sadd.s32 %s309, 1
    %s311 = scalar_select %p308, %s309, %s310
    %p314 = pneg %p308
    %p315 = scmp.eq.s32.totalorder %s21, 5
    %p316 = por %p314, %p315
    %p317 = scmp.ne.s32.totalorder %s309, %s312
    %p318 = scmp.eq.s32.totalorder %s21, 0
    %p319 = por %p317, %p318
    %p320 = scmp.ne.s32.totalorder %s309, %s312
    %p321 = scmp.eq.s32.totalorder %s26, 5
    %p322 = por %p320, %p321
    %p323 = scmp.ne.s32.totalorder %s312, %s313
    %p324 = scmp.eq.s32.totalorder %s26, 0
    %p325 = por %p323, %p324
    %p326 = scmp.ne.s32.totalorder %s312, %s313
    %p327 = scmp.eq.s32.totalorder %s27, 5
    %p328 = por %p326, %p327
    %p330 = scmp.ne.s32.totalorder %s313, %s329
    %p331 = scmp.eq.s32.totalorder %s27, 0
    %p332 = por %p330, %p331
    %s334 = sadd.s32 %s333, 1
    %p337 = scmp.eq.s32.totalorder %s21, 5
    %p338 = scmp.ne.s32.totalorder %s333, %s335
    %p339 = scmp.eq.s32.totalorder %s21, 0
    %p340 = por %p338, %p339
    %p341 = scmp.ne.s32.totalorder %s333, %s335
    %p342 = scmp.eq.s32.totalorder %s26, 5
    %p343 = por %p341, %p342
    %p344 = scmp.ne.s32.totalorder %s335, %s336
    %p345 = scmp.eq.s32.totalorder %s26, 0
    %p346 = por %p344, %p345
    %p347 = scmp.ne.s32.totalorder %s335, %s336
    %p348 = scmp.eq.s32.totalorder %s27, 5
    %p349 = por %p347, %p348
    %p351 = scmp.ne.s32.totalorder %s336, %s350
    %p352 = scmp.eq.s32.totalorder %s27, 0
    %p353 = por %p351, %p352
    %s355 = sadd.s32 %s354, 1
    %p358 = scmp.eq.s32.totalorder %s21, 5
    %p359 = scmp.ne.s32.totalorder %s354, %s356
    %p360 = scmp.eq.s32.totalorder %s21, 0
    %p361 = por %p359, %p360
    %p362 = scmp.ne.s32.totalorder %s354, %s356
    %p363 = scmp.eq.s32.totalorder %s26, 5
    %p364 = por %p362, %p363
    %p365 = scmp.ne.s32.totalorder %s356, %s357
    %p366 = scmp.eq.s32.totalorder %s26, 0
    %p367 = por %p365, %p366
    %p368 = scmp.ne.s32.totalorder %s356, %s357
    %p369 = scmp.eq.s32.totalorder %s27, 5
    %p370 = por %p368, %p369
    %p372 = scmp.ne.s32.totalorder %s357, %s371
    %p373 = scmp.eq.s32.totalorder %s27, 0
    %p374 = por %p372, %p373
    %s376 = sadd.s32 %s375, 1
    %p379 = scmp.eq.s32.totalorder %s21, 5
    %p380 = scmp.ne.s32.totalorder %s375, %s377
    %p381 = scmp.eq.s32.totalorder %s21, 0
    %p382 = por %p380, %p381
    %p383 = scmp.ne.s32.totalorder %s375, %s377
    %p384 = scmp.eq.s32.totalorder %s26, 5
    %p385 = por %p383, %p384
    %p386 = scmp.ne.s32.totalorder %s377, %s378
    %p387 = scmp.eq.s32.totalorder %s26, 0
    %p388 = por %p386, %p387
    %p389 = scmp.ne.s32.totalorder %s377, %s378
    %p390 = scmp.eq.s32.totalorder %s27, 5
    %p391 = por %p389, %p390
    %p393 = scmp.ne.s32.totalorder %s378, %s392
    %p394 = scmp.eq.s32.totalorder %s27, 0
    %p395 = por %p393, %p394
    %s397 = sadd.s32 %s396, 1
    %p400 = scmp.eq.s32.totalorder %s21, 5
    %p401 = scmp.ne.s32.totalorder %s396, %s398
    %p402 = scmp.eq.s32.totalorder %s21, 0
    %p403 = por %p401, %p402
    %p404 = scmp.ne.s32.totalorder %s396, %s398
    %p405 = scmp.eq.s32.totalorder %s26, 5
    %p406 = por %p404, %p405
    %p407 = scmp.ne.s32.totalorder %s398, %s399
    %p408 = scmp.eq.s32.totalorder %s26, 0
    %p409 = por %p407, %p408
    %p410 = scmp.ne.s32.totalorder %s398, %s399
    %p411 = scmp.eq.s32.totalorder %s27, 5
    %p412 = por %p410, %p411
    %p414 = scmp.ne.s32.totalorder %s399, %s413
    %p415 = scmp.eq.s32.totalorder %s27, 0
    %p416 = por %p414, %p415
    %p417 = scmp.le.s32.totalorder 1, %s21
    %p418 = scmp.lt.s32.totalorder %s21, 7
    %p419 = pnand %p417, %p418
    %p420 = pneg %p419
    // Predicated region
    $region9: #{tpu_custom_call.1} parent=5 // pred_check
      _
    $region10: #{tpu_custom_call.1} parent=5 // pred_check_branch
      %422 = sbr.rel (%p419) target = $region12
    $region11: #{tpu_custom_call.1} parent=5 // pred_region
      %s423 = ssub.s32 %s21, 1
      // Predicated region
      $region13: #{tpu_custom_call.1} parent=11 // pred_check
        %p424 = pneg %p54
      $region14: #{tpu_custom_call.1} parent=11 // pred_check_branch
        %426 = sbr.rel (%p424) target = $region16
      $region15: #{tpu_custom_call.1} parent=11 // pred_region
        _
      $region16: #{tpu_custom_call.1} parent=11 // pred_fallthru
        _
      // Predicated region
      $region17: #{tpu_custom_call.1} parent=11 // pred_check
        %p427 = pneg %p75
      $region18: #{tpu_custom_call.1} parent=11 // pred_check_branch
        %429 = sbr.rel (%p427) target = $region20
      $region19: #{tpu_custom_call.1} parent=11 // pred_region
        _
      $region20: #{tpu_custom_call.1} parent=11 // pred_fallthru
        _
      // Predicated region
      $region21: #{tpu_custom_call.1} parent=11 // pred_check
        %p430 = pneg %p148
      $region22: #{tpu_custom_call.1} parent=11 // pred_check_branch
        %432 = sbr.rel (%p430) target = $region24
      $region23: #{tpu_custom_call.1} parent=11 // pred_region
        _
      $region24: #{tpu_custom_call.1} parent=11 // pred_fallthru
        _
      // Predicated region
      $region25: #{tpu_custom_call.1} parent=11 // pred_check
        %p433 = pneg %p169
      $region26: #{tpu_custom_call.1} parent=11 // pred_check_branch
        %435 = sbr.rel (%p433) target = $region28
      $region27: #{tpu_custom_call.1} parent=11 // pred_region
        _
      $region28: #{tpu_custom_call.1} parent=11 // pred_fallthru
        _
      // Predicated region
      $region29: #{tpu_custom_call.1} parent=11 // pred_check
        %p436 = pneg %p346
      $region30: #{tpu_custom_call.1} parent=11 // pred_check_branch
        %438 = sbr.rel (%p436) target = $region32
      $region31: #{tpu_custom_call.1} parent=11 // pred_region
        _
      $region32: #{tpu_custom_call.1} parent=11 // pred_fallthru
        _
      // Predicated region
      $region33: #{tpu_custom_call.1} parent=11 // pred_check
        %p439 = pneg %p367
      $region34: #{tpu_custom_call.1} parent=11 // pred_check_branch
        %441 = sbr.rel (%p439) target = $region36
      $region35: #{tpu_custom_call.1} parent=11 // pred_region
        _
      $region36: #{tpu_custom_call.1} parent=11 // pred_fallthru
        _
      // Predicated region
      $region37: #{tpu_custom_call.1} parent=11 // pred_check
        %p442 = pneg %p388
      $region38: #{tpu_custom_call.1} parent=11 // pred_check_branch
        %444 = sbr.rel (%p442) target = $region40
      $region39: #{tpu_custom_call.1} parent=11 // pred_region
        _
      $region40: #{tpu_custom_call.1} parent=11 // pred_fallthru
        _
    $region12: #{tpu_custom_call.1} parent=5 // pred_fallthru
      _
    %p445 = scmp.lt.s32.totalorder %s21, 6
    // Predicated region
    $region41: #{tpu_custom_call.1} parent=5 // pred_check
      %p446 = pneg %p445
    $region42: #{tpu_custom_call.1} parent=5 // pred_check_branch
      %448 = sbr.rel (%p446) target = $region44
    $region43: #{tpu_custom_call.1} parent=5 // pred_region
      // Predicated region
      $region45: #{tpu_custom_call.1} parent=43 // pred_check
        %p449 = pneg %p95
      $region46: #{tpu_custom_call.1} parent=43 // pred_check_branch
        %451 = sbr.rel (%p449) target = $region48
      $region47: #{tpu_custom_call.1} parent=43 // pred_region
        %s452 = smul.u32 32, %s29
        %p453 = scmp.lt.s32.totalorder %s452, 63
        %s454 = scalar_select %p453, %s452, 63
        %s455 = smul.addr %s454, 8
        %s456 = scalar_lea.vmem %s2, %s455
        %s457 = smul.u32 32, %s29
      $region48: #{tpu_custom_call.1} parent=43 // pred_fallthru
        _
      // Predicated region
      $region49: #{tpu_custom_call.1} parent=43 // pred_check
        %p458 = pneg %p121
      $region50: #{tpu_custom_call.1} parent=43 // pred_check_branch
        %460 = sbr.rel (%p458) target = $region52
      $region51: #{tpu_custom_call.1} parent=43 // pred_region
        %s461 = smul.u32 32, %s29
        %p462 = scmp.lt.s32.totalorder %s461, 63
        %s463 = scalar_select %p462, %s461, 63
        %s464 = smul.addr %s463, 4
        %s465 = scalar_lea.vmem %s3, %s464
        %s466 = smul.u32 32, %s29
      $region52: #{tpu_custom_call.1} parent=43 // pred_fallthru
        _
      // Predicated region
      $region53: #{tpu_custom_call.1} parent=43 // pred_check
        %p467 = pneg %p189
      $region54: #{tpu_custom_call.1} parent=43 // pred_check_branch
        %469 = sbr.rel (%p467) target = $region56
      $region55: #{tpu_custom_call.1} parent=43 // pred_region
        %p470 = scmp.lt.s32.totalorder %s28, 2
        %s471 = scalar_select %p470, %s28, 2
        %s472 = smul.addr %s471, 2
        %s473 = smul.addr %s472, 4
        %s474 = scalar_lea.vmem %s6, %s473
      $region56: #{tpu_custom_call.1} parent=43 // pred_fallthru
        _
      // Predicated region
      $region57: #{tpu_custom_call.1} parent=43 // pred_check
        %p475 = pneg %p215
      $region58: #{tpu_custom_call.1} parent=43 // pred_check_branch
        %477 = sbr.rel (%p475) target = $region60
      $region59: #{tpu_custom_call.1} parent=43 // pred_region
        %p478 = scmp.lt.s32.totalorder %s28, 2
        %s479 = scalar_select %p478, %s28, 2
        %s480 = smul.addr %s479, 4
        %s481 = smul.addr %s480, 4
        %s482 = scalar_lea.vmem %s7, %s481
      $region60: #{tpu_custom_call.1} parent=43 // pred_fallthru
        _
      // Predicated region
      $region61: #{tpu_custom_call.1} parent=43 // pred_check
        %p483 = pneg %p241
      $region62: #{tpu_custom_call.1} parent=43 // pred_check_branch
        %485 = sbr.rel (%p483) target = $region64
      $region63: #{tpu_custom_call.1} parent=43 // pred_region
        %p486 = scmp.lt.s32.totalorder %s28, 2
        %s487 = scalar_select %p486, %s28, 2
        %s488 = smul.addr %s487, 4
        %s489 = smul.addr %s488, 4
        %s490 = scalar_lea.vmem %s8, %s489
      $region64: #{tpu_custom_call.1} parent=43 // pred_fallthru
        _
      // Predicated region
      $region65: #{tpu_custom_call.1} parent=43 // pred_check
        %p491 = pneg %p267
      $region66: #{tpu_custom_call.1} parent=43 // pred_check_branch
        %493 = sbr.rel (%p491) target = $region68
      $region67: #{tpu_custom_call.1} parent=43 // pred_region
        %p494 = scmp.lt.s32.totalorder %s28, 2
        %s495 = scalar_select %p494, %s28, 2
        %s496 = smul.addr %s495, 4
        %s497 = smul.addr %s496, 4
        %s498 = scalar_lea.vmem %s9, %s497
      $region68: #{tpu_custom_call.1} parent=43 // pred_fallthru
        _
      // Predicated region
      $region69: #{tpu_custom_call.1} parent=43 // pred_check
        %p499 = pneg %p293
      $region70: #{tpu_custom_call.1} parent=43 // pred_check_branch
        %501 = sbr.rel (%p499) target = $region72
      $region71: #{tpu_custom_call.1} parent=43 // pred_region
        %p502 = scmp.lt.s32.totalorder %s28, 2
        %s503 = scalar_select %p502, %s28, 2
        %s504 = smul.addr %s503, 4
        %s505 = smul.addr %s504, 4
        %s506 = scalar_lea.vmem %s10, %s505
      $region72: #{tpu_custom_call.1} parent=43 // pred_fallthru
        _
      // Predicated region
      $region73: #{tpu_custom_call.1} parent=43 // pred_check
        %p507 = pneg %p319
      $region74: #{tpu_custom_call.1} parent=43 // pred_check_branch
        %509 = sbr.rel (%p507) target = $region76
      $region75: #{tpu_custom_call.1} parent=43 // pred_region
        %p510 = scmp.lt.s32.totalorder %s28, 2
        %s511 = scalar_select %p510, %s28, 2
        %s512 = smul.addr %s511, 8
        %s513 = scalar_lea.vmem %s11, %s512
      $region76: #{tpu_custom_call.1} parent=43 // pred_fallthru
        _
    $region44: #{tpu_custom_call.1} parent=5 // pred_fallthru
      _
    %p514 = scmp.le.s32.totalorder 1, %s21
    %p515 = scmp.lt.s32.totalorder %s21, 7
    %p516 = pnand %p514, %p515
    %p517 = pneg %p516
    // Predicated region
    $region77: #{tpu_custom_call.1} parent=5 // pred_check
      _
    $region78: #{tpu_custom_call.1} parent=5 // pred_check_branch
      %519 = sbr.rel (%p516) target = $region80
    $region79: #{tpu_custom_call.1} parent=5 // pred_region
      %s520 = ssub.s32 %s21, 1
      %p521 = pneg %p54
      %p522 = pneg %p51
      %p523 = pneg %p75
      %p524 = pneg %p72
      %s525 = smul.u32 32, %s31
      %p526 = scmp.lt.s32.totalorder %s525, 63
      %s527 = scalar_select %p526, %s525, 63
      %s528 = smul.addr %s527, 8
      %s529 = scalar_lea.vmem %s2, %s528
      %p530 = pneg %p101
      %p531 = pneg %p98
      %s532 = smul.u32 32, %s31
      %p533 = scmp.lt.s32.totalorder %s532, 63
      %s534 = scalar_select %p533, %s532, 63
      %s535 = smul.addr %s534, 4
      %s536 = scalar_lea.vmem %s3, %s535
      %p537 = pneg %p127
      %p538 = pneg %p124
      %p539 = pneg %p148
      %p540 = pneg %p145
      %p541 = pneg %p169
      %p542 = pneg %p166
      %p543 = scmp.lt.s32.totalorder %s30, 2
      %s544 = scalar_select %p543, %s30, 2
      %s545 = smul.addr %s544, 2
      %s546 = smul.addr %s545, 4
      %s547 = scalar_lea.vmem %s6, %s546
      %p548 = pneg %p195
      %p549 = pneg %p192
      %p550 = scmp.lt.s32.totalorder %s30, 2
      %s551 = scalar_select %p550, %s30, 2
      %s552 = smul.addr %s551, 4
      %s553 = smul.addr %s552, 4
      %s554 = scalar_lea.vmem %s7, %s553
      %p555 = pneg %p221
      %p556 = pneg %p218
      %p557 = scmp.lt.s32.totalorder %s30, 2
      %s558 = scalar_select %p557, %s30, 2
      %s559 = smul.addr %s558, 4
      %s560 = smul.addr %s559, 4
      %s561 = scalar_lea.vmem %s8, %s560
      %p562 = pneg %p247
      %p563 = pneg %p244
      %p564 = scmp.lt.s32.totalorder %s30, 2
      %s565 = scalar_select %p564, %s30, 2
      %s566 = smul.addr %s565, 4
      %s567 = smul.addr %s566, 4
      %s568 = scalar_lea.vmem %s9, %s567
      %p569 = pneg %p273
      %p570 = pneg %p270
      %p571 = scmp.lt.s32.totalorder %s30, 2
      %s572 = scalar_select %p571, %s30, 2
      %s573 = smul.addr %s572, 4
      %s574 = smul.addr %s573, 4
      %s575 = scalar_lea.vmem %s10, %s574
      %p576 = pneg %p299
      %p577 = pneg %p296
      %p578 = scmp.lt.s32.totalorder %s30, 2
      %s579 = scalar_select %p578, %s30, 2
      %s580 = smul.addr %s579, 8
      %s581 = scalar_lea.vmem %s11, %s580
      %p582 = pneg %p325
      %p583 = pneg %p322
      %p584 = pneg %p346
      %p585 = pneg %p343
      %p586 = pneg %p367
      %p587 = pneg %p364
      %p588 = pneg %p388
      %p589 = pneg %p385
      %p590 = pneg %p409
      %p591 = pneg %p406
      %s592 = smul.u32 32, %s31
      %p593 = scmp.lt.s32.totalorder %s592, 63
      %s594 = scalar_select %p593, %s592, 63
      %s595 = smul.addr %s594, 8
      %s596 = scalar_lea.vmem %s2, %s595
      %s597 = smul.u32 32, %s31
      %s598 = smul.u32 32, %s31
      %p599 = scmp.lt.s32.totalorder %s598, 63
      %s600 = scalar_select %p599, %s598, 63
      %s601 = smul.addr %s600, 4
      %s602 = scalar_lea.vmem %s3, %s601
      %s603 = smul.u32 32, %s31
      %p604 = scmp.lt.s32.totalorder %s30, 2
      %s605 = scalar_select %p604, %s30, 2
      %s606 = smul.addr %s605, 2
      %s607 = smul.addr %s606, 4
      %s608 = scalar_lea.vmem %s6, %s607
      %p609 = scmp.lt.s32.totalorder %s30, 2
      %s610 = scalar_select %p609, %s30, 2
      %s611 = smul.addr %s610, 4
      %s612 = smul.addr %s611, 4
      %s613 = scalar_lea.vmem %s7, %s612
      %p614 = scmp.lt.s32.totalorder %s30, 2
      %s615 = scalar_select %p614, %s30, 2
      %s616 = smul.addr %s615, 4
      %s617 = smul.addr %s616, 4
      %s618 = scalar_lea.vmem %s8, %s617
      %p619 = scmp.lt.s32.totalorder %s30, 2
      %s620 = scalar_select %p619, %s30, 2
      %s621 = smul.addr %s620, 4
      %s622 = smul.addr %s621, 4
      %s623 = scalar_lea.vmem %s9, %s622
      %p624 = scmp.lt.s32.totalorder %s30, 2
      %s625 = scalar_select %p624, %s30, 2
      %s626 = smul.addr %s625, 4
      %s627 = smul.addr %s626, 4
      %s628 = scalar_lea.vmem %s10, %s627
      %p629 = scmp.lt.s32.totalorder %s30, 2
      %s630 = scalar_select %p629, %s30, 2
      %s631 = smul.addr %s630, 8
      %s632 = scalar_lea.vmem %s11, %s631
      %v634 = vld [vmem:[%s14] sm:$0xff]
      %v635 = vld [vmem:[%s632] sm:$0xff]
      %p636 = scmp.eq.s32.totalorder %s30, 0
      %p637 = scmp.eq.s32.totalorder %s31, 0
      %p638 = pnand %p636, %p637
      %p639 = pneg %p638
      // Predicated region
      $region81: #{tpu_custom_call.1} parent=79 // pred_check
        _
      $region82: #{tpu_custom_call.1} parent=79 // pred_check_branch
        %641 = sbr.rel (%p638) target = $region84
      $region83: #{tpu_custom_call.1} parent=79 // pred_region
        %v642 = vld [vmem:[%s0] sm:$0xf]
        %v643 = vld [vmem:[%s0 + $0x4] sm:$0xf]
        %v644 = vld [vmem:[%s0 + $0x8] sm:$0xf]
        %v645 = vld [vmem:[%s12] sm:$0xf]
        %v646 = vld [vmem:[%s12 + $0x4] sm:$0xf]
        %v647 = vlaneseq
        %v648 = vshrl.u32 %v647, 7
        %v649 = vsub.s32 0, %v648
        %v650 = vrot.slane %v634, %v649
        %v654 = vunpack.c.l.b16 %v642
        %v655 = vunpack.c.l.b16 %v643
        %v656 = vunpack.c.l.b16 %v644
        %v657 = vpack.c.b16 %v655, %v654
        %v658 = vpack.c.b16 %v656, %v656
        %v661 = vunpack.c.l.b16 %v645
        %v662 = vunpack.c.l.b16 %v646
        %v663 = vpack.c.b16 %v662, %v661
        %vm665 = vcmask 130048
        %v667 = vsel %vm665, %v657, 0
        %v670 = vsel %vm665, %v658, 0
        %672 = vmatprep.subr.bf16.mxu0 0
        %673 = vmatpush1.bf16.msra.mxu0 0
        %674 = vmatprep.subr.bf16.mxu0 0
        %675 = vmatpush1.bf16.msra.mxu0 0
        %676 = vmatprep.subr.bf16.mxu0 0
        %677 = vmatpush1.bf16.msra.mxu0 0
        %678 = vmatprep.subr.bf16.mxu0 0
        %679 = vmatpush1.bf16.msra.mxu0 0
        %680 = vmatprep.subr.bf16.mxu0 0
        %681 = vmatpush1.bf16.msra.mxu0 0
        %682 = vmatprep.subr.bf16.mxu0 0
        %683 = vmatpush1.bf16.msra.mxu0 0
        %684 = vmatprep.subr.bf16.mxu0 0
        %685 = vmatpush1.bf16.msra.mxu0 0
        %686 = vmatprep.subr.bf16.mxu0 0
        %687 = vmatpush1.bf16.msra.mxu0 %v663
        %688 = vmatprep.subr.bf16.mxu0 0
        %689 = vmatpush2.bf16.msra.mxu0 0
        %690 = vmatprep.subr.bf16.mxu0 0
        %691 = vmatpush2.bf16.msra.mxu0 0
        %692 = vmatprep.subr.bf16.mxu0 0
        %693 = vmatpush2.bf16.msra.mxu0 0
        %694 = vmatprep.subr.bf16.mxu0 0
        %695 = vmatpush2.bf16.msra.mxu0 0
        %696 = vmatprep.subr.bf16.mxu0 0
        %697 = vmatpush2.bf16.msra.mxu0 0
        %698 = vmatprep.subr.bf16.mxu0 0
        %699 = vmatpush2.bf16.msra.mxu0 0
        %700 = vmatprep.subr.bf16.mxu0 0
        %701 = vmatpush2.bf16.msra.mxu0 0
        %702 = vmatprep.subr.bf16.mxu0 0
        %703 = vmatpush2.bf16.msra.mxu0 0
        %704 = vmatprep.mubr.bf16.mxu0 0
        %705 = vmatmul.mubr.bf16.gmra.mxu0 %v667
        %v706 = vpop.f32.mrf.mxu0
        %v707 = vadd.f32 %v650, %v706
        %v708 = vpop.f32.mrf.mxu0
        %v709 = vpop.f32.mrf.mxu0
        %v710 = vadd.f32 %v650, %v709
        %v711 = vpop.f32.mrf.mxu0
        %712 = vmatprep.mubr.bf16.mxu0 0
        %713 = vmatmul.mubr.bf16.gmra.mxu0 %v670
        %v714 = vpop.f32.mrf.mxu0
        %v715 = vadd.f32 %v650, %v714
        %v716 = vpop.f32.mrf.mxu0
        %v717 = vpop.f32.mrf.mxu0
        %v718 = vpop.f32.mrf.mxu0
        %719 = vdwg.mxu0
        %v720 = vmax.f32 %v707, 0.0
        %v721 = vmax.f32 %v710, 0.0
        %v722 = vmax.f32 %v715, 0.0
        %vm723 = vcmask 261120
        %724 = vst.msk [vmem:[#allocation2] sm:$0xff] %vm723, %v720
        %725 = vst.msk [vmem:[#allocation2 + $0x8] sm:$0xff] %vm723, %v721
        %726 = vst.msk [vmem:[#allocation2 + $0x10] sm:$0xff] %vm723, %v722
      $region84: #{tpu_custom_call.1} parent=79 // pred_fallthru
        _
      // Predicated region
      $region85: #{tpu_custom_call.1} parent=79 // pred_check
        %p727 = pneg %p637
      $region86: #{tpu_custom_call.1} parent=79 // pred_check_branch
        %729 = sbr.rel (%p727) target = $region88
      $region87: #{tpu_custom_call.1} parent=79 // pred_region
        %v730 = vld [vmem:[#allocation2] sm:$0xff]
        %v731 = vld [vmem:[#allocation2 + $0x8] sm:$0xff]
        %v732 = vld [vmem:[#allocation2 + $0x10] sm:$0xff]
        %v733 = vpack.c.bf16 %v731, %v730
        %v734 = vpack.c.bf16 %v732, %v732
        %v735 = vld [vmem:[%s618] sm:$0xf]
        %v736 = vld [vmem:[%s618 + $0x4] sm:$0xf]
        %v737 = vld [vmem:[%s618 + $0x8] sm:$0xf]
        %v738 = vld [vmem:[%s618 + $0xc] sm:$0xf]
        %v743 = vunpack.c.l.b16 %v735
        %v744 = vunpack.c.l.b16 %v736
        %v745 = vunpack.c.l.b16 %v737
        %v746 = vunpack.c.l.b16 %v738
        %v747 = vpack.c.b16 %v744, %v743
        %v748 = vpack.c.b16 %v746, %v745
        %vm751 = vcmask 261120
        %v753 = vsel %vm751, %v733, 0
        %v756 = vsel %vm751, %v734, 0
        %758 = vmatprep.subr.bf16.mxu0 0
        %759 = vmatpush1.bf16.msra.mxu0 0
        %760 = vmatprep.subr.bf16.mxu0 0
        %761 = vmatpush1.bf16.msra.mxu0 0
        %762 = vmatprep.subr.bf16.mxu0 0
        %763 = vmatpush1.bf16.msra.mxu0 0
        %764 = vmatprep.subr.bf16.mxu0 0
        %765 = vmatpush1.bf16.msra.mxu0 0
        %766 = vmatprep.subr.bf16.mxu0 0
        %767 = vmatpush1.bf16.msra.mxu0 0
        %768 = vmatprep.subr.bf16.mxu0 0
        %769 = vmatpush1.bf16.msra.mxu0 0
        %770 = vmatprep.subr.bf16.mxu0 0
        %771 = vmatpush1.bf16.msra.mxu0 %v748
        %772 = vmatprep.subr.bf16.mxu0 0
        %773 = vmatpush1.bf16.msra.mxu0 %v747
        %774 = vmatprep.subr.bf16.mxu0 0
        %775 = vmatpush2.bf16.msra.mxu0 0
        %776 = vmatprep.subr.bf16.mxu0 0
        %777 = vmatpush2.bf16.msra.mxu0 0
        %778 = vmatprep.subr.bf16.mxu0 0
        %779 = vmatpush2.bf16.msra.mxu0 0
        %780 = vmatprep.subr.bf16.mxu0 0
        %781 = vmatpush2.bf16.msra.mxu0 0
        %782 = vmatprep.subr.bf16.mxu0 0
        %783 = vmatpush2.bf16.msra.mxu0 0
        %784 = vmatprep.subr.bf16.mxu0 0
        %785 = vmatpush2.bf16.msra.mxu0 0
        %786 = vmatprep.subr.bf16.mxu0 0
        %787 = vmatpush2.bf16.msra.mxu0 0
        %788 = vmatprep.subr.bf16.mxu0 0
        %789 = vmatpush2.bf16.msra.mxu0 0
        %790 = vmatprep.mubr.bf16.mxu0 0
        %791 = vmatmul.mubr.bf16.gmra.mxu0 %v753
        %v792 = vpop.f32.mrf.mxu0
        %v793 = vadd.f32 0.0, %v792
        %v794 = vpop.f32.mrf.mxu0
        %v795 = vpop.f32.mrf.mxu0
        %v796 = vadd.f32 0.0, %v795
        %v797 = vpop.f32.mrf.mxu0
        %798 = vmatprep.mubr.bf16.mxu0 0
        %799 = vmatmul.mubr.bf16.gmra.mxu0 %v756
        %v800 = vpop.f32.mrf.mxu0
        %v801 = vadd.f32 0.0, %v800
        %v802 = vpop.f32.mrf.mxu0
        %v803 = vpop.f32.mrf.mxu0
        %v804 = vpop.f32.mrf.mxu0
        %805 = vdwg.mxu0
        %v806 = vpack.c.bf16 %v796, %v793
        %v807 = vpack.c.bf16 %v801, %v801
        %v810 = vunpack.c.l.b16 %v806
        %v811 = vunpack.c.h.b16 %v806
        %v812 = vunpack.c.l.b16 %v807
        %v813 = vpack.c.b16 %v810, %v810
        %v814 = vpack.c.b16 %v811, %v811
        %v815 = vpack.c.b16 %v812, %v812
        %vm819 = vcmask 257024
        %820 = vst.msk [vmem:[#allocation3] sm:$0xf] %vm819, %v813
        %821 = vst.msk [vmem:[#allocation3 + $0x4] sm:$0xf] %vm819, %v814
        %822 = vst.msk [vmem:[#allocation3 + $0x8] sm:$0xf] %vm819, %v815
        %823 = vst.msk [vmem:[#allocation4] sm:$0xff] %vm751, 0.0
        %824 = vst.msk [vmem:[#allocation4 + $0x8] sm:$0xff] %vm751, 0.0
        %825 = vst.msk [vmem:[#allocation4 + $0x10] sm:$0xff] %vm751, 0.0
      $region88: #{tpu_custom_call.1} parent=79 // pred_fallthru
        _
      %v826 = vld [vmem:[%s596] sm:$0xff]
      %v827 = vld [vmem:[%s596 + $0x8] sm:$0xff]
      %v828 = vld [vmem:[%s596 + $0x10] sm:$0xff]
      %v829 = vld [vmem:[%s596 + $0x18] sm:$0xff]
      %v830 = vld [vmem:[%s596 + $0x20] sm:$0xff]
      %v831 = vld [vmem:[%s596 + $0x28] sm:$0xff]
      %v832 = vld [vmem:[%s596 + $0x30] sm:$0xff]
      %v833 = vld [vmem:[%s596 + $0x38] sm:$0xff]
      %v834 = vld [vmem:[%s596 + $0x40] sm:$0xff]
      %v835 = vld [vmem:[%s596 + $0x48] sm:$0xff]
      %v836 = vld [vmem:[%s596 + $0x50] sm:$0xff]
      %v837 = vld [vmem:[%s596 + $0x58] sm:$0xff]
      %v838 = vld [vmem:[%s596 + $0x60] sm:$0xff]
      %v839 = vld [vmem:[%s596 + $0x68] sm:$0xff]
      %v840 = vld [vmem:[%s596 + $0x70] sm:$0xff]
      %v841 = vld [vmem:[%s596 + $0x78] sm:$0xff]
      %v842 = vld [vmem:[%s596 + $0x80] sm:$0xff]
      %v843 = vld [vmem:[%s596 + $0x88] sm:$0xff]
      %v844 = vld [vmem:[%s596 + $0x90] sm:$0xff]
      %v845 = vld [vmem:[%s596 + $0x98] sm:$0xff]
      %v846 = vld [vmem:[%s596 + $0xa0] sm:$0xff]
      %v847 = vld [vmem:[%s596 + $0xa8] sm:$0xff]
      %v848 = vld [vmem:[%s596 + $0xb0] sm:$0xff]
      %v849 = vld [vmem:[%s596 + $0xb8] sm:$0xff]
      %v850 = vld [vmem:[%s596 + $0xc0] sm:$0xff]
      %v851 = vld [vmem:[%s596 + $0xc8] sm:$0xff]
      %v852 = vld [vmem:[%s596 + $0xd0] sm:$0xff]
      %v853 = vld [vmem:[%s596 + $0xd8] sm:$0xff]
      %v854 = vld [vmem:[%s596 + $0xe0] sm:$0xff]
      %v855 = vld [vmem:[%s596 + $0xe8] sm:$0xff]
      %v856 = vld [vmem:[%s596 + $0xf0] sm:$0xff]
      %v857 = vld [vmem:[%s596 + $0xf8] sm:$0xff]
      %v858 = vld [vmem:[%s602] sm:$0xf]
      %v859 = vld [vmem:[%s602 + $0x4] sm:$0xf]
      %v860 = vld [vmem:[%s602 + $0x8] sm:$0xf]
      %v861 = vld [vmem:[%s602 + $0xc] sm:$0xf]
      %v862 = vld [vmem:[%s602 + $0x10] sm:$0xf]
      %v863 = vld [vmem:[%s602 + $0x14] sm:$0xf]
      %v864 = vld [vmem:[%s602 + $0x18] sm:$0xf]
      %v865 = vld [vmem:[%s602 + $0x1c] sm:$0xf]
      %v866 = vld [vmem:[%s602 + $0x20] sm:$0xf]
      %v867 = vld [vmem:[%s602 + $0x24] sm:$0xf]
      %v868 = vld [vmem:[%s602 + $0x28] sm:$0xf]
      %v869 = vld [vmem:[%s602 + $0x2c] sm:$0xf]
      %v870 = vld [vmem:[%s602 + $0x30] sm:$0xf]
      %v871 = vld [vmem:[%s602 + $0x34] sm:$0xf]
      %v872 = vld [vmem:[%s602 + $0x38] sm:$0xf]
      %v873 = vld [vmem:[%s602 + $0x3c] sm:$0xf]
      %v874 = vld [vmem:[%s602 + $0x40] sm:$0xf]
      %v875 = vld [vmem:[%s602 + $0x44] sm:$0xf]
      %v876 = vld [vmem:[%s602 + $0x48] sm:$0xf]
      %v877 = vld [vmem:[%s602 + $0x4c] sm:$0xf]
      %v878 = vld [vmem:[%s602 + $0x50] sm:$0xf]
      %v879 = vld [vmem:[%s602 + $0x54] sm:$0xf]
      %v880 = vld [vmem:[%s602 + $0x58] sm:$0xf]
      %v881 = vld [vmem:[%s602 + $0x5c] sm:$0xf]
      %v882 = vld [vmem:[%s602 + $0x60] sm:$0xf]
      %v883 = vld [vmem:[%s602 + $0x64] sm:$0xf]
      %v884 = vld [vmem:[%s602 + $0x68] sm:$0xf]
      %v885 = vld [vmem:[%s602 + $0x6c] sm:$0xf]
      %v886 = vld [vmem:[%s602 + $0x70] sm:$0xf]
      %v887 = vld [vmem:[%s602 + $0x74] sm:$0xf]
      %v888 = vld [vmem:[%s602 + $0x78] sm:$0xf]
      %v889 = vld [vmem:[%s602 + $0x7c] sm:$0xf]
      %v890 = vld [vmem:[%s608] sm:$0xf]
      %v891 = vld [vmem:[%s608 + $0x4] sm:$0xf]
      %v892 = vlaneseq
      %v893 = vshrl.u32 %v892, 7
      %v894 = vsub.s32 0, %v893
      %v895 = vrot.slane %v635, %v894
      %v928 = vunpack.c.l.b16 %v858
      %v929 = vunpack.c.l.b16 %v859
      %v930 = vunpack.c.l.b16 %v860
      %v931 = vunpack.c.l.b16 %v861
      %v932 = vunpack.c.l.b16 %v862
      %v933 = vunpack.c.l.b16 %v863
      %v934 = vunpack.c.l.b16 %v864
      %v935 = vunpack.c.l.b16 %v865
      %v936 = vunpack.c.l.b16 %v866
      %v937 = vunpack.c.l.b16 %v867
      %v938 = vunpack.c.l.b16 %v868
      %v939 = vunpack.c.l.b16 %v869
      %v940 = vunpack.c.l.b16 %v870
      %v941 = vunpack.c.l.b16 %v871
      %v942 = vunpack.c.l.b16 %v872
      %v943 = vunpack.c.l.b16 %v873
      %v944 = vunpack.c.l.b16 %v874
      %v945 = vunpack.c.l.b16 %v875
      %v946 = vunpack.c.l.b16 %v876
      %v947 = vunpack.c.l.b16 %v877
      %v948 = vunpack.c.l.b16 %v878
      %v949 = vunpack.c.l.b16 %v879
      %v950 = vunpack.c.l.b16 %v880
      %v951 = vunpack.c.l.b16 %v881
      %v952 = vunpack.c.l.b16 %v882
      %v953 = vunpack.c.l.b16 %v883
      %v954 = vunpack.c.l.b16 %v884
      %v955 = vunpack.c.l.b16 %v885
      %v956 = vunpack.c.l.b16 %v886
      %v957 = vunpack.c.l.b16 %v887
      %v958 = vunpack.c.l.b16 %v888
      %v959 = vunpack.c.l.b16 %v889
      %v960 = vpack.c.b16 %v929, %v928
      %v961 = vpack.c.b16 %v931, %v930
      %v962 = vpack.c.b16 %v933, %v932
      %v963 = vpack.c.b16 %v935, %v934
      %v964 = vpack.c.b16 %v937, %v936
      %v965 = vpack.c.b16 %v939, %v938
      %v966 = vpack.c.b16 %v941, %v940
      %v967 = vpack.c.b16 %v943, %v942
      %v968 = vpack.c.b16 %v945, %v944
      %v969 = vpack.c.b16 %v947, %v946
      %v970 = vpack.c.b16 %v949, %v948
      %v971 = vpack.c.b16 %v951, %v950
      %v972 = vpack.c.b16 %v953, %v952
      %v973 = vpack.c.b16 %v955, %v954
      %v974 = vpack.c.b16 %v957, %v956
      %v975 = vpack.c.b16 %v959, %v958
      %v978 = vunpack.c.l.b16 %v890
      %v979 = vunpack.c.l.b16 %v891
      %v980 = vpack.c.b16 %v979, %v978
      %vm982 = vcmask 130048
      %v984 = vsel %vm982, %v960, 0
      %v987 = vsel %vm982, %v961, 0
      %v990 = vsel %vm982, %v962, 0
      %v993 = vsel %vm982, %v963, 0
      %v996 = vsel %vm982, %v964, 0
      %v999 = vsel %vm982, %v965, 0
      %v1002 = vsel %vm982, %v966, 0
      %v1005 = vsel %vm982, %v967, 0
      %v1008 = vsel %vm982, %v968, 0
      %v1011 = vsel %vm982, %v969, 0
      %v1014 = vsel %vm982, %v970, 0
      %v1017 = vsel %vm982, %v971, 0
      %v1020 = vsel %vm982, %v972, 0
      %v1023 = vsel %vm982, %v973, 0
      %v1026 = vsel %vm982, %v974, 0
      %v1029 = vsel %vm982, %v975, 0
      %1031 = vmatprep.subr.bf16.mxu0 0
      %1032 = vmatpush1.bf16.msra.mxu0 0
      %1033 = vmatprep.subr.bf16.mxu0 0
      %1034 = vmatpush1.bf16.msra.mxu0 0
      %1035 = vmatprep.subr.bf16.mxu0 0
      %1036 = vmatpush1.bf16.msra.mxu0 0
      %1037 = vmatprep.subr.bf16.mxu0 0
      %1038 = vmatpush1.bf16.msra.mxu0 0
      %1039 = vmatprep.subr.bf16.mxu0 0
      %1040 = vmatpush1.bf16.msra.mxu0 0
      %1041 = vmatprep.subr.bf16.mxu0 0
      %1042 = vmatpush1.bf16.msra.mxu0 0
      %1043 = vmatprep.subr.bf16.mxu0 0
      %1044 = vmatpush1.bf16.msra.mxu0 0
      %1045 = vmatprep.subr.bf16.mxu0 0
      %1046 = vmatpush1.bf16.msra.mxu0 %v980
      %1047 = vmatprep.subr.bf16.mxu0 0
      %1048 = vmatpush2.bf16.msra.mxu0 0
      %1049 = vmatprep.subr.bf16.mxu0 0
      %1050 = vmatpush2.bf16.msra.mxu0 0
      %1051 = vmatprep.subr.bf16.mxu0 0
      %1052 = vmatpush2.bf16.msra.mxu0 0
      %1053 = vmatprep.subr.bf16.mxu0 0
      %1054 = vmatpush2.bf16.msra.mxu0 0
      %1055 = vmatprep.subr.bf16.mxu0 0
      %1056 = vmatpush2.bf16.msra.mxu0 0
      %1057 = vmatprep.subr.bf16.mxu0 0
      %1058 = vmatpush2.bf16.msra.mxu0 0
      %1059 = vmatprep.subr.bf16.mxu0 0
      %1060 = vmatpush2.bf16.msra.mxu0 0
      %1061 = vmatprep.subr.bf16.mxu0 0
      %1062 = vmatpush2.bf16.msra.mxu0 0
      %1063 = vmatprep.mubr.bf16.mxu0 0
      %1064 = vmatmul.mubr.bf16.gmra.mxu0 %v984
      %v1065 = vpop.f32.mrf.mxu0
      %v1066 = vadd.f32 %v895, %v1065
      %v1067 = vpop.f32.mrf.mxu0
      %v1068 = vpop.f32.mrf.mxu0
      %v1069 = vadd.f32 %v895, %v1068
      %v1070 = vpop.f32.mrf.mxu0
      %1071 = vmatprep.mubr.bf16.mxu0 0
      %1072 = vmatmul.mubr.bf16.gmra.mxu0 %v987
      %v1073 = vpop.f32.mrf.mxu0
      %v1074 = vadd.f32 %v895, %v1073
      %v1075 = vpop.f32.mrf.mxu0
      %v1076 = vpop.f32.mrf.mxu0
      %v1077 = vadd.f32 %v895, %v1076
      %v1078 = vpop.f32.mrf.mxu0
      %1079 = vmatprep.mubr.bf16.mxu0 0
      %1080 = vmatmul.mubr.bf16.gmra.mxu0 %v990
      %v1081 = vpop.f32.mrf.mxu0
      %v1082 = vadd.f32 %v895, %v1081
      %v1083 = vpop.f32.mrf.mxu0
      %v1084 = vpop.f32.mrf.mxu0
      %v1085 = vadd.f32 %v895, %v1084
      %v1086 = vpop.f32.mrf.mxu0
      %1087 = vmatprep.mubr.bf16.mxu0 0
      %1088 = vmatmul.mubr.bf16.gmra.mxu0 %v993
      %v1089 = vpop.f32.mrf.mxu0
      %v1090 = vadd.f32 %v895, %v1089
      %v1091 = vpop.f32.mrf.mxu0
      %v1092 = vpop.f32.mrf.mxu0
      %v1093 = vadd.f32 %v895, %v1092
      %v1094 = vpop.f32.mrf.mxu0
      %1095 = vmatprep.mubr.bf16.mxu0 0
      %1096 = vmatmul.mubr.bf16.gmra.mxu0 %v996
      %v1097 = vpop.f32.mrf.mxu0
      %v1098 = vadd.f32 %v895, %v1097
      %v1099 = vpop.f32.mrf.mxu0
      %v1100 = vpop.f32.mrf.mxu0
      %v1101 = vadd.f32 %v895, %v1100
      %v1102 = vpop.f32.mrf.mxu0
      %1103 = vmatprep.mubr.bf16.mxu0 0
      %1104 = vmatmul.mubr.bf16.gmra.mxu0 %v999
      %v1105 = vpop.f32.mrf.mxu0
      %v1106 = vadd.f32 %v895, %v1105
      %v1107 = vpop.f32.mrf.mxu0
      %v1108 = vpop.f32.mrf.mxu0
      %v1109 = vadd.f32 %v895, %v1108
      %v1110 = vpop.f32.mrf.mxu0
      %1111 = vmatprep.mubr.bf16.mxu0 0
      %1112 = vmatmul.mubr.bf16.gmra.mxu0 %v1002
      %v1113 = vpop.f32.mrf.mxu0
      %v1114 = vadd.f32 %v895, %v1113
      %v1115 = vpop.f32.mrf.mxu0
      %v1116 = vpop.f32.mrf.mxu0
      %v1117 = vadd.f32 %v895, %v1116
      %v1118 = vpop.f32.mrf.mxu0
      %1119 = vmatprep.mubr.bf16.mxu0 0
      %1120 = vmatmul.mubr.bf16.gmra.mxu0 %v1005
      %v1121 = vpop.f32.mrf.mxu0
      %v1122 = vadd.f32 %v895, %v1121
      %v1123 = vpop.f32.mrf.mxu0
      %v1124 = vpop.f32.mrf.mxu0
      %v1125 = vadd.f32 %v895, %v1124
      %v1126 = vpop.f32.mrf.mxu0
      %1127 = vmatprep.mubr.bf16.mxu0 0
      %1128 = vmatmul.mubr.bf16.gmra.mxu0 %v1008
      %v1129 = vpop.f32.mrf.mxu0
      %v1130 = vadd.f32 %v895, %v1129
      %v1131 = vpop.f32.mrf.mxu0
      %v1132 = vpop.f32.mrf.mxu0
      %v1133 = vadd.f32 %v895, %v1132
      %v1134 = vpop.f32.mrf.mxu0
      %1135 = vmatprep.mubr.bf16.mxu0 0
      %1136 = vmatmul.mubr.bf16.gmra.mxu0 %v1011
      %v1137 = vpop.f32.mrf.mxu0
      %v1138 = vadd.f32 %v895, %v1137
      %v1139 = vpop.f32.mrf.mxu0
      %v1140 = vpop.f32.mrf.mxu0
      %v1141 = vadd.f32 %v895, %v1140
      %v1142 = vpop.f32.mrf.mxu0
      %1143 = vmatprep.mubr.bf16.mxu0 0
      %1144 = vmatmul.mubr.bf16.gmra.mxu0 %v1014
      %v1145 = vpop.f32.mrf.mxu0
      %v1146 = vadd.f32 %v895, %v1145
      %v1147 = vpop.f32.mrf.mxu0
      %v1148 = vpop.f32.mrf.mxu0
      %v1149 = vadd.f32 %v895, %v1148
      %v1150 = vpop.f32.mrf.mxu0
      %1151 = vmatprep.mubr.bf16.mxu0 0
      %1152 = vmatmul.mubr.bf16.gmra.mxu0 %v1017
      %v1153 = vpop.f32.mrf.mxu0
      %v1154 = vadd.f32 %v895, %v1153
      %v1155 = vpop.f32.mrf.mxu0
      %v1156 = vpop.f32.mrf.mxu0
      %v1157 = vadd.f32 %v895, %v1156
      %v1158 = vpop.f32.mrf.mxu0
      %1159 = vmatprep.mubr.bf16.mxu0 0
      %1160 = vmatmul.mubr.bf16.gmra.mxu0 %v1020
      %v1161 = vpop.f32.mrf.mxu0
      %v1162 = vadd.f32 %v895, %v1161
      %v1163 = vpop.f32.mrf.mxu0
      %v1164 = vpop.f32.mrf.mxu0
      %v1165 = vadd.f32 %v895, %v1164
      %v1166 = vpop.f32.mrf.mxu0
      %1167 = vmatprep.mubr.bf16.mxu0 0
      %1168 = vmatmul.mubr.bf16.gmra.mxu0 %v1023
      %v1169 = vpop.f32.mrf.mxu0
      %v1170 = vadd.f32 %v895, %v1169
      %v1171 = vpop.f32.mrf.mxu0
      %v1172 = vpop.f32.mrf.mxu0
      %v1173 = vadd.f32 %v895, %v1172
      %v1174 = vpop.f32.mrf.mxu0
      %1175 = vmatprep.mubr.bf16.mxu0 0
      %1176 = vmatmul.mubr.bf16.gmra.mxu0 %v1026
      %v1177 = vpop.f32.mrf.mxu0
      %v1178 = vadd.f32 %v895, %v1177
      %v1179 = vpop.f32.mrf.mxu0
      %v1180 = vpop.f32.mrf.mxu0
      %v1181 = vadd.f32 %v895, %v1180
      %v1182 = vpop.f32.mrf.mxu0
      %1183 = vmatprep.mubr.bf16.mxu0 0
      %1184 = vmatmul.mubr.bf16.gmra.mxu0 %v1029
      %v1185 = vpop.f32.mrf.mxu0
      %v1186 = vadd.f32 %v895, %v1185
      %v1187 = vpop.f32.mrf.mxu0
      %v1188 = vpop.f32.mrf.mxu0
      %v1189 = vadd.f32 %v895, %v1188
      %v1190 = vpop.f32.mrf.mxu0
      %1191 = vdwg.mxu0
      %v1192 = vmax.f32 %v1066, 0.0
      %v1193 = vmax.f32 %v1069, 0.0
      %v1194 = vmax.f32 %v1074, 0.0
      %v1195 = vmax.f32 %v1077, 0.0
      %v1196 = vmax.f32 %v1082, 0.0
      %v1197 = vmax.f32 %v1085, 0.0
      %v1198 = vmax.f32 %v1090, 0.0
      %v1199 = vmax.f32 %v1093, 0.0
      %v1200 = vmax.f32 %v1098, 0.0
      %v1201 = vmax.f32 %v1101, 0.0
      %v1202 = vmax.f32 %v1106, 0.0
      %v1203 = vmax.f32 %v1109, 0.0
      %v1204 = vmax.f32 %v1114, 0.0
      %v1205 = vmax.f32 %v1117, 0.0
      %v1206 = vmax.f32 %v1122, 0.0
      %v1207 = vmax.f32 %v1125, 0.0
      %v1208 = vmax.f32 %v1130, 0.0
      %v1209 = vmax.f32 %v1133, 0.0
      %v1210 = vmax.f32 %v1138, 0.0
      %v1211 = vmax.f32 %v1141, 0.0
      %v1212 = vmax.f32 %v1146, 0.0
      %v1213 = vmax.f32 %v1149, 0.0
      %v1214 = vmax.f32 %v1154, 0.0
      %v1215 = vmax.f32 %v1157, 0.0
      %v1216 = vmax.f32 %v1162, 0.0
      %v1217 = vmax.f32 %v1165, 0.0
      %v1218 = vmax.f32 %v1170, 0.0
      %v1219 = vmax.f32 %v1173, 0.0
      %v1220 = vmax.f32 %v1178, 0.0
      %v1221 = vmax.f32 %v1181, 0.0
      %v1222 = vmax.f32 %v1186, 0.0
      %v1223 = vmax.f32 %v1189, 0.0
      %v1224 = vand.u32 2147483647, %v1066
      %v1225 = vand.u32 2147483647, %v1069
      %v1226 = vand.u32 2147483647, %v1074
      %v1227 = vand.u32 2147483647, %v1077
      %v1228 = vand.u32 2147483647, %v1082
      %v1229 = vand.u32 2147483647, %v1085
      %v1230 = vand.u32 2147483647, %v1090
      %v1231 = vand.u32 2147483647, %v1093
      %v1232 = vand.u32 2147483647, %v1098
      %v1233 = vand.u32 2147483647, %v1101
      %v1234 = vand.u32 2147483647, %v1106
      %v1235 = vand.u32 2147483647, %v1109
      %v1236 = vand.u32 2147483647, %v1114
      %v1237 = vand.u32 2147483647, %v1117
      %v1238 = vand.u32 2147483647, %v1122
      %v1239 = vand.u32 2147483647, %v1125
      %v1240 = vand.u32 2147483647, %v1130
      %v1241 = vand.u32 2147483647, %v1133
      %v1242 = vand.u32 2147483647, %v1138
      %v1243 = vand.u32 2147483647, %v1141
      %v1244 = vand.u32 2147483647, %v1146
      %v1245 = vand.u32 2147483647, %v1149
      %v1246 = vand.u32 2147483647, %v1154
      %v1247 = vand.u32 2147483647, %v1157
      %v1248 = vand.u32 2147483647, %v1162
      %v1249 = vand.u32 2147483647, %v1165
      %v1250 = vand.u32 2147483647, %v1170
      %v1251 = vand.u32 2147483647, %v1173
      %v1252 = vand.u32 2147483647, %v1178
      %v1253 = vand.u32 2147483647, %v1181
      %v1254 = vand.u32 2147483647, %v1186
      %v1255 = vand.u32 2147483647, %v1189
      %v1256 = vsub.f32 0.0, %v1224
      %v1257 = vsub.f32 0.0, %v1225
      %v1258 = vsub.f32 0.0, %v1226
      %v1259 = vsub.f32 0.0, %v1227
      %v1260 = vsub.f32 0.0, %v1228
      %v1261 = vsub.f32 0.0, %v1229
      %v1262 = vsub.f32 0.0, %v1230
      %v1263 = vsub.f32 0.0, %v1231
      %v1264 = vsub.f32 0.0, %v1232
      %v1265 = vsub.f32 0.0, %v1233
      %v1266 = vsub.f32 0.0, %v1234
      %v1267 = vsub.f32 0.0, %v1235
      %v1268 = vsub.f32 0.0, %v1236
      %v1269 = vsub.f32 0.0, %v1237
      %v1270 = vsub.f32 0.0, %v1238
      %v1271 = vsub.f32 0.0, %v1239
      %v1272 = vsub.f32 0.0, %v1240
      %v1273 = vsub.f32 0.0, %v1241
      %v1274 = vsub.f32 0.0, %v1242
      %v1275 = vsub.f32 0.0, %v1243
      %v1276 = vsub.f32 0.0, %v1244
      %v1277 = vsub.f32 0.0, %v1245
      %v1278 = vsub.f32 0.0, %v1246
      %v1279 = vsub.f32 0.0, %v1247
      %v1280 = vsub.f32 0.0, %v1248
      %v1281 = vsub.f32 0.0, %v1249
      %v1282 = vsub.f32 0.0, %v1250
      %v1283 = vsub.f32 0.0, %v1251
      %v1284 = vsub.f32 0.0, %v1252
      %v1285 = vsub.f32 0.0, %v1253
      %v1286 = vsub.f32 0.0, %v1254
      %v1287 = vsub.f32 0.0, %v1255
      %v1288 = vmul.f32 %v1256, 1.442695
      %v1289 = vpow.pop %v1288
      %v1290 = vmul.f32 %v1257, 1.442695
      %v1291 = vpow.pop %v1290
      %v1292 = vmul.f32 %v1258, 1.442695
      %v1293 = vpow.pop %v1292
      %v1294 = vmul.f32 %v1259, 1.442695
      %v1295 = vpow.pop %v1294
      %v1296 = vmul.f32 %v1260, 1.442695
      %v1297 = vpow.pop %v1296
      %v1298 = vmul.f32 %v1261, 1.442695
      %v1299 = vpow.pop %v1298
      %v1300 = vmul.f32 %v1262, 1.442695
      %v1301 = vpow.pop %v1300
      %v1302 = vmul.f32 %v1263, 1.442695
      %v1303 = vpow.pop %v1302
      %v1304 = vmul.f32 %v1264, 1.442695
      %v1305 = vpow.pop %v1304
      %v1306 = vmul.f32 %v1265, 1.442695
      %v1307 = vpow.pop %v1306
      %v1308 = vmul.f32 %v1266, 1.442695
      %v1309 = vpow.pop %v1308
      %v1310 = vmul.f32 %v1267, 1.442695
      %v1311 = vpow.pop %v1310
      %v1312 = vmul.f32 %v1268, 1.442695
      %v1313 = vpow.pop %v1312
      %v1314 = vmul.f32 %v1269, 1.442695
      %v1315 = vpow.pop %v1314
      %v1316 = vmul.f32 %v1270, 1.442695
      %v1317 = vpow.pop %v1316
      %v1318 = vmul.f32 %v1271, 1.442695
      %v1319 = vpow.pop %v1318
      %v1320 = vmul.f32 %v1272, 1.442695
      %v1321 = vpow.pop %v1320
      %v1322 = vmul.f32 %v1273, 1.442695
      %v1323 = vpow.pop %v1322
      %v1324 = vmul.f32 %v1274, 1.442695
      %v1325 = vpow.pop %v1324
      %v1326 = vmul.f32 %v1275, 1.442695
      %v1327 = vpow.pop %v1326
      %v1328 = vmul.f32 %v1276, 1.442695
      %v1329 = vpow.pop %v1328
      %v1330 = vmul.f32 %v1277, 1.442695
      %v1331 = vpow.pop %v1330
      %v1332 = vmul.f32 %v1278, 1.442695
      %v1333 = vpow.pop %v1332
      %v1334 = vmul.f32 %v1279, 1.442695
      %v1335 = vpow.pop %v1334
      %v1336 = vmul.f32 %v1280, 1.442695
      %v1337 = vpow.pop %v1336
      %v1338 = vmul.f32 %v1281, 1.442695
      %v1339 = vpow.pop %v1338
      %v1340 = vmul.f32 %v1282, 1.442695
      %v1341 = vpow.pop %v1340
      %v1342 = vmul.f32 %v1283, 1.442695
      %v1343 = vpow.pop %v1342
      %v1344 = vmul.f32 %v1284, 1.442695
      %v1345 = vpow.pop %v1344
      %v1346 = vmul.f32 %v1285, 1.442695
      %v1347 = vpow.pop %v1346
      %v1348 = vmul.f32 %v1286, 1.442695
      %v1349 = vpow.pop %v1348
      %v1350 = vmul.f32 %v1287, 1.442695
      %v1351 = vpow.pop %v1350
      %v1352 = vadd.f32 %v1289, 1.0
      %v1353 = vadd.f32 %v1291, 1.0
      %v1354 = vadd.f32 %v1293, 1.0
      %v1355 = vadd.f32 %v1295, 1.0
      %v1356 = vadd.f32 %v1297, 1.0
      %v1357 = vadd.f32 %v1299, 1.0
      %v1358 = vadd.f32 %v1301, 1.0
      %v1359 = vadd.f32 %v1303, 1.0
      %v1360 = vadd.f32 %v1305, 1.0
      %v1361 = vadd.f32 %v1307, 1.0
      %v1362 = vadd.f32 %v1309, 1.0
      %v1363 = vadd.f32 %v1311, 1.0
      %v1364 = vadd.f32 %v1313, 1.0
      %v1365 = vadd.f32 %v1315, 1.0
      %v1366 = vadd.f32 %v1317, 1.0
      %v1367 = vadd.f32 %v1319, 1.0
      %v1368 = vadd.f32 %v1321, 1.0
      %v1369 = vadd.f32 %v1323, 1.0
      %v1370 = vadd.f32 %v1325, 1.0
      %v1371 = vadd.f32 %v1327, 1.0
      %v1372 = vadd.f32 %v1329, 1.0
      %v1373 = vadd.f32 %v1331, 1.0
      %v1374 = vadd.f32 %v1333, 1.0
      %v1375 = vadd.f32 %v1335, 1.0
      %v1376 = vadd.f32 %v1337, 1.0
      %v1377 = vadd.f32 %v1339, 1.0
      %v1378 = vadd.f32 %v1341, 1.0
      %v1379 = vadd.f32 %v1343, 1.0
      %v1380 = vadd.f32 %v1345, 1.0
      %v1381 = vadd.f32 %v1347, 1.0
      %v1382 = vadd.f32 %v1349, 1.0
      %v1383 = vadd.f32 %v1351, 1.0
      %v1384 = vlog2.pop %v1352
      %v1385 = vmul.f32 %v1384, 0.6931472
      %v1386 = vlog2.pop %v1353
      %v1387 = vmul.f32 %v1386, 0.6931472
      %v1388 = vlog2.pop %v1354
      %v1389 = vmul.f32 %v1388, 0.6931472
      %v1390 = vlog2.pop %v1355
      %v1391 = vmul.f32 %v1390, 0.6931472
      %v1392 = vlog2.pop %v1356
      %v1393 = vmul.f32 %v1392, 0.6931472
      %v1394 = vlog2.pop %v1357
      %v1395 = vmul.f32 %v1394, 0.6931472
      %v1396 = vlog2.pop %v1358
      %v1397 = vmul.f32 %v1396, 0.6931472
      %v1398 = vlog2.pop %v1359
      %v1399 = vmul.f32 %v1398, 0.6931472
      %v1400 = vlog2.pop %v1360
      %v1401 = vmul.f32 %v1400, 0.6931472
      %v1402 = vlog2.pop %v1361
      %v1403 = vmul.f32 %v1402, 0.6931472
      %v1404 = vlog2.pop %v1362
      %v1405 = vmul.f32 %v1404, 0.6931472
      %v1406 = vlog2.pop %v1363
      %v1407 = vmul.f32 %v1406, 0.6931472
      %v1408 = vlog2.pop %v1364
      %v1409 = vmul.f32 %v1408, 0.6931472
      %v1410 = vlog2.pop %v1365
      %v1411 = vmul.f32 %v1410, 0.6931472
      %v1412 = vlog2.pop %v1366
      %v1413 = vmul.f32 %v1412, 0.6931472
      %v1414 = vlog2.pop %v1367
      %v1415 = vmul.f32 %v1414, 0.6931472
      %v1416 = vlog2.pop %v1368
      %v1417 = vmul.f32 %v1416, 0.6931472
      %v1418 = vlog2.pop %v1369
      %v1419 = vmul.f32 %v1418, 0.6931472
      %v1420 = vlog2.pop %v1370
      %v1421 = vmul.f32 %v1420, 0.6931472
      %v1422 = vlog2.pop %v1371
      %v1423 = vmul.f32 %v1422, 0.6931472
      %v1424 = vlog2.pop %v1372
      %v1425 = vmul.f32 %v1424, 0.6931472
      %v1426 = vlog2.pop %v1373
      %v1427 = vmul.f32 %v1426, 0.6931472
      %v1428 = vlog2.pop %v1374
      %v1429 = vmul.f32 %v1428, 0.6931472
      %v1430 = vlog2.pop %v1375
      %v1431 = vmul.f32 %v1430, 0.6931472
      %v1432 = vlog2.pop %v1376
      %v1433 = vmul.f32 %v1432, 0.6931472
      %v1434 = vlog2.pop %v1377
      %v1435 = vmul.f32 %v1434, 0.6931472
      %v1436 = vlog2.pop %v1378
      %v1437 = vmul.f32 %v1436, 0.6931472
      %v1438 = vlog2.pop %v1379
      %v1439 = vmul.f32 %v1438, 0.6931472
      %v1440 = vlog2.pop %v1380
      %v1441 = vmul.f32 %v1440, 0.6931472
      %v1442 = vlog2.pop %v1381
      %v1443 = vmul.f32 %v1442, 0.6931472
      %v1444 = vlog2.pop %v1382
      %v1445 = vmul.f32 %v1444, 0.6931472
      %v1446 = vlog2.pop %v1383
      %v1447 = vmul.f32 %v1446, 0.6931472
      %v1448 = vadd.f32 %v1192, %v1385
      %v1449 = vadd.f32 %v1193, %v1387
      %v1450 = vadd.f32 %v1194, %v1389
      %v1451 = vadd.f32 %v1195, %v1391
      %v1452 = vadd.f32 %v1196, %v1393
      %v1453 = vadd.f32 %v1197, %v1395
      %v1454 = vadd.f32 %v1198, %v1397
      %v1455 = vadd.f32 %v1199, %v1399
      %v1456 = vadd.f32 %v1200, %v1401
      %v1457 = vadd.f32 %v1201, %v1403
      %v1458 = vadd.f32 %v1202, %v1405
      %v1459 = vadd.f32 %v1203, %v1407
      %v1460 = vadd.f32 %v1204, %v1409
      %v1461 = vadd.f32 %v1205, %v1411
      %v1462 = vadd.f32 %v1206, %v1413
      %v1463 = vadd.f32 %v1207, %v1415
      %v1464 = vadd.f32 %v1208, %v1417
      %v1465 = vadd.f32 %v1209, %v1419
      %v1466 = vadd.f32 %v1210, %v1421
      %v1467 = vadd.f32 %v1211, %v1423
      %v1468 = vadd.f32 %v1212, %v1425
      %v1469 = vadd.f32 %v1213, %v1427
      %v1470 = vadd.f32 %v1214, %v1429
      %v1471 = vadd.f32 %v1215, %v1431
      %v1472 = vadd.f32 %v1216, %v1433
      %v1473 = vadd.f32 %v1217, %v1435
      %v1474 = vadd.f32 %v1218, %v1437
      %v1475 = vadd.f32 %v1219, %v1439
      %v1476 = vadd.f32 %v1220, %v1441
      %v1477 = vadd.f32 %v1221, %v1443
      %v1478 = vadd.f32 %v1222, %v1445
      %v1479 = vadd.f32 %v1223, %v1447
      %v1480 = vsub.f32 %v1448, 0.6931472
      %v1481 = vsub.f32 %v1449, 0.6931472
      %v1482 = vsub.f32 %v1450, 0.6931472
      %v1483 = vsub.f32 %v1451, 0.6931472
      %v1484 = vsub.f32 %v1452, 0.6931472
      %v1485 = vsub.f32 %v1453, 0.6931472
      %v1486 = vsub.f32 %v1454, 0.6931472
      %v1487 = vsub.f32 %v1455, 0.6931472
      %v1488 = vsub.f32 %v1456, 0.6931472
      %v1489 = vsub.f32 %v1457, 0.6931472
      %v1490 = vsub.f32 %v1458, 0.6931472
      %v1491 = vsub.f32 %v1459, 0.6931472
      %v1492 = vsub.f32 %v1460, 0.6931472
      %v1493 = vsub.f32 %v1461, 0.6931472
      %v1494 = vsub.f32 %v1462, 0.6931472
      %v1495 = vsub.f32 %v1463, 0.6931472
      %v1496 = vsub.f32 %v1464, 0.6931472
      %v1497 = vsub.f32 %v1465, 0.6931472
      %v1498 = vsub.f32 %v1466, 0.6931472
      %v1499 = vsub.f32 %v1467, 0.6931472
      %v1500 = vsub.f32 %v1468, 0.6931472
      %v1501 = vsub.f32 %v1469, 0.6931472
      %v1502 = vsub.f32 %v1470, 0.6931472
      %v1503 = vsub.f32 %v1471, 0.6931472
      %v1504 = vsub.f32 %v1472, 0.6931472
      %v1505 = vsub.f32 %v1473, 0.6931472
      %v1506 = vsub.f32 %v1474, 0.6931472
      %v1507 = vsub.f32 %v1475, 0.6931472
      %v1508 = vsub.f32 %v1476, 0.6931472
      %v1509 = vsub.f32 %v1477, 0.6931472
      %v1510 = vsub.f32 %v1478, 0.6931472
      %v1511 = vsub.f32 %v1479, 0.6931472
      %v1512 = vpack.c.bf16 %v1481, %v1480
      %v1513 = vpack.c.bf16 %v1483, %v1482
      %v1514 = vpack.c.bf16 %v1485, %v1484
      %v1515 = vpack.c.bf16 %v1487, %v1486
      %v1516 = vpack.c.bf16 %v1489, %v1488
      %v1517 = vpack.c.bf16 %v1491, %v1490
      %v1518 = vpack.c.bf16 %v1493, %v1492
      %v1519 = vpack.c.bf16 %v1495, %v1494
      %v1520 = vpack.c.bf16 %v1497, %v1496
      %v1521 = vpack.c.bf16 %v1499, %v1498
      %v1522 = vpack.c.bf16 %v1501, %v1500
      %v1523 = vpack.c.bf16 %v1503, %v1502
      %v1524 = vpack.c.bf16 %v1505, %v1504
      %v1525 = vpack.c.bf16 %v1507, %v1506
      %v1526 = vpack.c.bf16 %v1509, %v1508
      %v1527 = vpack.c.bf16 %v1511, %v1510
      %v1528 = vld [vmem:[%s613] sm:$0xf]
      %v1529 = vld [vmem:[%s613 + $0x4] sm:$0xf]
      %v1530 = vld [vmem:[%s613 + $0x8] sm:$0xf]
      %v1531 = vld [vmem:[%s613 + $0xc] sm:$0xf]
      %v1532 = vlaneseq
      %v1533 = vshrl.u32 %v1532, 7
      %v1534 = vsub.s32 1, %v1533
      %v1535 = vrot.slane %v635, %v1534
      %v1540 = vunpack.c.l.b16 %v1528
      %v1541 = vunpack.c.l.b16 %v1529
      %v1542 = vunpack.c.l.b16 %v1530
      %v1543 = vunpack.c.l.b16 %v1531
      %v1544 = vpack.c.b16 %v1541, %v1540
      %v1545 = vpack.c.b16 %v1543, %v1542
      %vm1548 = vcmask 261120
      %v1550 = vsel %vm1548, %v1512, 0
      %v1553 = vsel %vm1548, %v1513, 0
      %v1556 = vsel %vm1548, %v1514, 0
      %v1559 = vsel %vm1548, %v1515, 0
      %v1562 = vsel %vm1548, %v1516, 0
      %v1565 = vsel %vm1548, %v1517, 0
      %v1568 = vsel %vm1548, %v1518, 0
      %v1571 = vsel %vm1548, %v1519, 0
      %v1574 = vsel %vm1548, %v1520, 0
      %v1577 = vsel %vm1548, %v1521, 0
      %v1580 = vsel %vm1548, %v1522, 0
      %v1583 = vsel %vm1548, %v1523, 0
      %v1586 = vsel %vm1548, %v1524, 0
      %v1589 = vsel %vm1548, %v1525, 0
      %v1592 = vsel %vm1548, %v1526, 0
      %v1595 = vsel %vm1548, %v1527, 0
      %1597 = vmatprep.subr.bf16.mxu0 0
      %1598 = vmatpush1.bf16.msra.mxu0 0
      %1599 = vmatprep.subr.bf16.mxu0 0
      %1600 = vmatpush1.bf16.msra.mxu0 0
      %1601 = vmatprep.subr.bf16.mxu0 0
      %1602 = vmatpush1.bf16.msra.mxu0 0
      %1603 = vmatprep.subr.bf16.mxu0 0
      %1604 = vmatpush1.bf16.msra.mxu0 0
      %1605 = vmatprep.subr.bf16.mxu0 0
      %1606 = vmatpush1.bf16.msra.mxu0 0
      %1607 = vmatprep.subr.bf16.mxu0 0
      %1608 = vmatpush1.bf16.msra.mxu0 0
      %1609 = vmatprep.subr.bf16.mxu0 0
      %1610 = vmatpush1.bf16.msra.mxu0 %v1545
      %1611 = vmatprep.subr.bf16.mxu0 0
      %1612 = vmatpush1.bf16.msra.mxu0 %v1544
      %1613 = vmatprep.subr.bf16.mxu0 0
      %1614 = vmatpush2.bf16.msra.mxu0 0
      %1615 = vmatprep.subr.bf16.mxu0 0
      %1616 = vmatpush2.bf16.msra.mxu0 0
      %1617 = vmatprep.subr.bf16.mxu0 0
      %1618 = vmatpush2.bf16.msra.mxu0 0
      %1619 = vmatprep.subr.bf16.mxu0 0
      %1620 = vmatpush2.bf16.msra.mxu0 0
      %1621 = vmatprep.subr.bf16.mxu0 0
      %1622 = vmatpush2.bf16.msra.mxu0 0
      %1623 = vmatprep.subr.bf16.mxu0 0
      %1624 = vmatpush2.bf16.msra.mxu0 0
      %1625 = vmatprep.subr.bf16.mxu0 0
      %1626 = vmatpush2.bf16.msra.mxu0 0
      %1627 = vmatprep.subr.bf16.mxu0 0
      %1628 = vmatpush2.bf16.msra.mxu0 0
      %1629 = vmatprep.mubr.bf16.mxu0 0
      %1630 = vmatmul.mubr.bf16.gmra.mxu0 %v1550
      %v1631 = vpop.f32.mrf.mxu0
      %v1632 = vadd.f32 %v1535, %v1631
      %v1633 = vpop.f32.mrf.mxu0
      %v1634 = vpop.f32.mrf.mxu0
      %v1635 = vadd.f32 %v1535, %v1634
      %v1636 = vpop.f32.mrf.mxu0
      %1637 = vmatprep.mubr.bf16.mxu0 0
      %1638 = vmatmul.mubr.bf16.gmra.mxu0 %v1553
      %v1639 = vpop.f32.mrf.mxu0
      %v1640 = vadd.f32 %v1535, %v1639
      %v1641 = vpop.f32.mrf.mxu0
      %v1642 = vpop.f32.mrf.mxu0
      %v1643 = vadd.f32 %v1535, %v1642
      %v1644 = vpop.f32.mrf.mxu0
      %1645 = vmatprep.mubr.bf16.mxu0 0
      %1646 = vmatmul.mubr.bf16.gmra.mxu0 %v1556
      %v1647 = vpop.f32.mrf.mxu0
      %v1648 = vadd.f32 %v1535, %v1647
      %v1649 = vpop.f32.mrf.mxu0
      %v1650 = vpop.f32.mrf.mxu0
      %v1651 = vadd.f32 %v1535, %v1650
      %v1652 = vpop.f32.mrf.mxu0
      %1653 = vmatprep.mubr.bf16.mxu0 0
      %1654 = vmatmul.mubr.bf16.gmra.mxu0 %v1559
      %v1655 = vpop.f32.mrf.mxu0
      %v1656 = vadd.f32 %v1535, %v1655
      %v1657 = vpop.f32.mrf.mxu0
      %v1658 = vpop.f32.mrf.mxu0
      %v1659 = vadd.f32 %v1535, %v1658
      %v1660 = vpop.f32.mrf.mxu0
      %1661 = vmatprep.mubr.bf16.mxu0 0
      %1662 = vmatmul.mubr.bf16.gmra.mxu0 %v1562
      %v1663 = vpop.f32.mrf.mxu0
      %v1664 = vadd.f32 %v1535, %v1663
      %v1665 = vpop.f32.mrf.mxu0
      %v1666 = vpop.f32.mrf.mxu0
      %v1667 = vadd.f32 %v1535, %v1666
      %v1668 = vpop.f32.mrf.mxu0
      %1669 = vmatprep.mubr.bf16.mxu0 0
      %1670 = vmatmul.mubr.bf16.gmra.mxu0 %v1565
      %v1671 = vpop.f32.mrf.mxu0
      %v1672 = vadd.f32 %v1535, %v1671
      %v1673 = vpop.f32.mrf.mxu0
      %v1674 = vpop.f32.mrf.mxu0
      %v1675 = vadd.f32 %v1535, %v1674
      %v1676 = vpop.f32.mrf.mxu0
      %1677 = vmatprep.mubr.bf16.mxu0 0
      %1678 = vmatmul.mubr.bf16.gmra.mxu0 %v1568
      %v1679 = vpop.f32.mrf.mxu0
      %v1680 = vadd.f32 %v1535, %v1679
      %v1681 = vpop.f32.mrf.mxu0
      %v1682 = vpop.f32.mrf.mxu0
      %v1683 = vadd.f32 %v1535, %v1682
      %v1684 = vpop.f32.mrf.mxu0
      %1685 = vmatprep.mubr.bf16.mxu0 0
      %1686 = vmatmul.mubr.bf16.gmra.mxu0 %v1571
      %v1687 = vpop.f32.mrf.mxu0
      %v1688 = vadd.f32 %v1535, %v1687
      %v1689 = vpop.f32.mrf.mxu0
      %v1690 = vpop.f32.mrf.mxu0
      %v1691 = vadd.f32 %v1535, %v1690
      %v1692 = vpop.f32.mrf.mxu0
      %1693 = vmatprep.mubr.bf16.mxu0 0
      %1694 = vmatmul.mubr.bf16.gmra.mxu0 %v1574
      %v1695 = vpop.f32.mrf.mxu0
      %v1696 = vadd.f32 %v1535, %v1695
      %v1697 = vpop.f32.mrf.mxu0
      %v1698 = vpop.f32.mrf.mxu0
      %v1699 = vadd.f32 %v1535, %v1698
      %v1700 = vpop.f32.mrf.mxu0
      %1701 = vmatprep.mubr.bf16.mxu0 0
      %1702 = vmatmul.mubr.bf16.gmra.mxu0 %v1577
      %v1703 = vpop.f32.mrf.mxu0
      %v1704 = vadd.f32 %v1535, %v1703
      %v1705 = vpop.f32.mrf.mxu0
      %v1706 = vpop.f32.mrf.mxu0
      %v1707 = vadd.f32 %v1535, %v1706
      %v1708 = vpop.f32.mrf.mxu0
      %1709 = vmatprep.mubr.bf16.mxu0 0
      %1710 = vmatmul.mubr.bf16.gmra.mxu0 %v1580
      %v1711 = vpop.f32.mrf.mxu0
      %v1712 = vadd.f32 %v1535, %v1711
      %v1713 = vpop.f32.mrf.mxu0
      %v1714 = vpop.f32.mrf.mxu0
      %v1715 = vadd.f32 %v1535, %v1714
      %v1716 = vpop.f32.mrf.mxu0
      %1717 = vmatprep.mubr.bf16.mxu0 0
      %1718 = vmatmul.mubr.bf16.gmra.mxu0 %v1583
      %v1719 = vpop.f32.mrf.mxu0
      %v1720 = vadd.f32 %v1535, %v1719
      %v1721 = vpop.f32.mrf.mxu0
      %v1722 = vpop.f32.mrf.mxu0
      %v1723 = vadd.f32 %v1535, %v1722
      %v1724 = vpop.f32.mrf.mxu0
      %1725 = vmatprep.mubr.bf16.mxu0 0
      %1726 = vmatmul.mubr.bf16.gmra.mxu0 %v1586
      %v1727 = vpop.f32.mrf.mxu0
      %v1728 = vadd.f32 %v1535, %v1727
      %v1729 = vpop.f32.mrf.mxu0
      %v1730 = vpop.f32.mrf.mxu0
      %v1731 = vadd.f32 %v1535, %v1730
      %v1732 = vpop.f32.mrf.mxu0
      %1733 = vmatprep.mubr.bf16.mxu0 0
      %1734 = vmatmul.mubr.bf16.gmra.mxu0 %v1589
      %v1735 = vpop.f32.mrf.mxu0
      %v1736 = vadd.f32 %v1535, %v1735
      %v1737 = vpop.f32.mrf.mxu0
      %v1738 = vpop.f32.mrf.mxu0
      %v1739 = vadd.f32 %v1535, %v1738
      %v1740 = vpop.f32.mrf.mxu0
      %1741 = vmatprep.mubr.bf16.mxu0 0
      %1742 = vmatmul.mubr.bf16.gmra.mxu0 %v1592
      %v1743 = vpop.f32.mrf.mxu0
      %v1744 = vadd.f32 %v1535, %v1743
      %v1745 = vpop.f32.mrf.mxu0
      %v1746 = vpop.f32.mrf.mxu0
      %v1747 = vadd.f32 %v1535, %v1746
      %v1748 = vpop.f32.mrf.mxu0
      %1749 = vmatprep.mubr.bf16.mxu0 0
      %1750 = vmatmul.mubr.bf16.gmra.mxu0 %v1595
      %v1751 = vpop.f32.mrf.mxu0
      %v1752 = vadd.f32 %v1535, %v1751
      %v1753 = vpop.f32.mrf.mxu0
      %v1754 = vpop.f32.mrf.mxu0
      %v1755 = vadd.f32 %v1535, %v1754
      %v1756 = vpop.f32.mrf.mxu0
      %1757 = vdwg.mxu0
      %1759 = vset.pattern.permute.xlu0 0
      %1760 = vperm.xlu0 %1759, %v826
      %v1761 = vpop.permute.xlu0 %1760
      %1764 = vset.pattern.permute.xlu0 0
      %1765 = vperm.xlu0 %1764, %v827
      %v1766 = vpop.permute.xlu0 %1765
      %1769 = vset.pattern.permute.xlu0 0
      %1770 = vperm.xlu0 %1769, %v828
      %v1771 = vpop.permute.xlu0 %1770
      %1774 = vset.pattern.permute.xlu0 0
      %1775 = vperm.xlu0 %1774, %v829
      %v1776 = vpop.permute.xlu0 %1775
      %1779 = vset.pattern.permute.xlu0 0
      %1780 = vperm.xlu0 %1779, %v830
      %v1781 = vpop.permute.xlu0 %1780
      %1784 = vset.pattern.permute.xlu0 0
      %1785 = vperm.xlu0 %1784, %v831
      %v1786 = vpop.permute.xlu0 %1785
      %1789 = vset.pattern.permute.xlu0 0
      %1790 = vperm.xlu0 %1789, %v832
      %v1791 = vpop.permute.xlu0 %1790
      %1794 = vset.pattern.permute.xlu0 0
      %1795 = vperm.xlu0 %1794, %v833
      %v1796 = vpop.permute.xlu0 %1795
      %1799 = vset.pattern.permute.xlu0 0
      %1800 = vperm.xlu0 %1799, %v834
      %v1801 = vpop.permute.xlu0 %1800
      %1804 = vset.pattern.permute.xlu0 0
      %1805 = vperm.xlu0 %1804, %v835
      %v1806 = vpop.permute.xlu0 %1805
      %1809 = vset.pattern.permute.xlu0 0
      %1810 = vperm.xlu0 %1809, %v836
      %v1811 = vpop.permute.xlu0 %1810
      %1814 = vset.pattern.permute.xlu0 0
      %1815 = vperm.xlu0 %1814, %v837
      %v1816 = vpop.permute.xlu0 %1815
      %1819 = vset.pattern.permute.xlu0 0
      %1820 = vperm.xlu0 %1819, %v838
      %v1821 = vpop.permute.xlu0 %1820
      %1824 = vset.pattern.permute.xlu0 0
      %1825 = vperm.xlu0 %1824, %v839
      %v1826 = vpop.permute.xlu0 %1825
      %1829 = vset.pattern.permute.xlu0 0
      %1830 = vperm.xlu0 %1829, %v840
      %v1831 = vpop.permute.xlu0 %1830
      %1834 = vset.pattern.permute.xlu0 0
      %1835 = vperm.xlu0 %1834, %v841
      %v1836 = vpop.permute.xlu0 %1835
      %1839 = vset.pattern.permute.xlu0 0
      %1840 = vperm.xlu0 %1839, %v842
      %v1841 = vpop.permute.xlu0 %1840
      %1844 = vset.pattern.permute.xlu0 0
      %1845 = vperm.xlu0 %1844, %v843
      %v1846 = vpop.permute.xlu0 %1845
      %1849 = vset.pattern.permute.xlu0 0
      %1850 = vperm.xlu0 %1849, %v844
      %v1851 = vpop.permute.xlu0 %1850
      %1854 = vset.pattern.permute.xlu0 0
      %1855 = vperm.xlu0 %1854, %v845
      %v1856 = vpop.permute.xlu0 %1855
      %1859 = vset.pattern.permute.xlu0 0
      %1860 = vperm.xlu0 %1859, %v846
      %v1861 = vpop.permute.xlu0 %1860
      %1864 = vset.pattern.permute.xlu0 0
      %1865 = vperm.xlu0 %1864, %v847
      %v1866 = vpop.permute.xlu0 %1865
      %1869 = vset.pattern.permute.xlu0 0
      %1870 = vperm.xlu0 %1869, %v848
      %v1871 = vpop.permute.xlu0 %1870
      %1874 = vset.pattern.permute.xlu0 0
      %1875 = vperm.xlu0 %1874, %v849
      %v1876 = vpop.permute.xlu0 %1875
      %1879 = vset.pattern.permute.xlu0 0
      %1880 = vperm.xlu0 %1879, %v850
      %v1881 = vpop.permute.xlu0 %1880
      %1884 = vset.pattern.permute.xlu0 0
      %1885 = vperm.xlu0 %1884, %v851
      %v1886 = vpop.permute.xlu0 %1885
      %1889 = vset.pattern.permute.xlu0 0
      %1890 = vperm.xlu0 %1889, %v852
      %v1891 = vpop.permute.xlu0 %1890
      %1894 = vset.pattern.permute.xlu0 0
      %1895 = vperm.xlu0 %1894, %v853
      %v1896 = vpop.permute.xlu0 %1895
      %1899 = vset.pattern.permute.xlu0 0
      %1900 = vperm.xlu0 %1899, %v854
      %v1901 = vpop.permute.xlu0 %1900
      %1904 = vset.pattern.permute.xlu0 0
      %1905 = vperm.xlu0 %1904, %v855
      %v1906 = vpop.permute.xlu0 %1905
      %1909 = vset.pattern.permute.xlu0 0
      %1910 = vperm.xlu0 %1909, %v856
      %v1911 = vpop.permute.xlu0 %1910
      %1914 = vset.pattern.permute.xlu0 0
      %1915 = vperm.xlu0 %1914, %v857
      %v1916 = vpop.permute.xlu0 %1915
      %v1918 = vmul.f32 %v1632, %v1761
      %v1919 = vmul.f32 %v1635, %v1766
      %v1920 = vmul.f32 %v1640, %v1771
      %v1921 = vmul.f32 %v1643, %v1776
      %v1922 = vmul.f32 %v1648, %v1781
      %v1923 = vmul.f32 %v1651, %v1786
      %v1924 = vmul.f32 %v1656, %v1791
      %v1925 = vmul.f32 %v1659, %v1796
      %v1926 = vmul.f32 %v1664, %v1801
      %v1927 = vmul.f32 %v1667, %v1806
      %v1928 = vmul.f32 %v1672, %v1811
      %v1929 = vmul.f32 %v1675, %v1816
      %v1930 = vmul.f32 %v1680, %v1821
      %v1931 = vmul.f32 %v1683, %v1826
      %v1932 = vmul.f32 %v1688, %v1831
      %v1933 = vmul.f32 %v1691, %v1836
      %v1934 = vmul.f32 %v1696, %v1841
      %v1935 = vmul.f32 %v1699, %v1846
      %v1936 = vmul.f32 %v1704, %v1851
      %v1937 = vmul.f32 %v1707, %v1856
      %v1938 = vmul.f32 %v1712, %v1861
      %v1939 = vmul.f32 %v1715, %v1866
      %v1940 = vmul.f32 %v1720, %v1871
      %v1941 = vmul.f32 %v1723, %v1876
      %v1942 = vmul.f32 %v1728, %v1881
      %v1943 = vmul.f32 %v1731, %v1886
      %v1944 = vmul.f32 %v1736, %v1891
      %v1945 = vmul.f32 %v1739, %v1896
      %v1946 = vmul.f32 %v1744, %v1901
      %v1947 = vmul.f32 %v1747, %v1906
      %v1948 = vmul.f32 %v1752, %v1911
      %v1949 = vmul.f32 %v1755, %v1916
      %s1950 = smul.u32 %s31, 32
      %s1951 = smul.addr %s1950, 4
      %s1952 = scalar_lea.vmem %s4, %s1951
      %v1953 = vld [vmem:[%s1952] sm:$0xf]
      %v1954 = vld [vmem:[%s1952 + $0x4] sm:$0xf]
      %v1955 = vld [vmem:[%s1952 + $0x8] sm:$0xf]
      %v1956 = vld [vmem:[%s1952 + $0xc] sm:$0xf]
      %v1957 = vld [vmem:[%s1952 + $0x10] sm:$0xf]
      %v1958 = vld [vmem:[%s1952 + $0x14] sm:$0xf]
      %v1959 = vld [vmem:[%s1952 + $0x18] sm:$0xf]
      %v1960 = vld [vmem:[%s1952 + $0x1c] sm:$0xf]
      %v1961 = vld [vmem:[%s1952 + $0x20] sm:$0xf]
      %v1962 = vld [vmem:[%s1952 + $0x24] sm:$0xf]
      %v1963 = vld [vmem:[%s1952 + $0x28] sm:$0xf]
      %v1964 = vld [vmem:[%s1952 + $0x2c] sm:$0xf]
      %v1965 = vld [vmem:[%s1952 + $0x30] sm:$0xf]
      %v1966 = vld [vmem:[%s1952 + $0x34] sm:$0xf]
      %v1967 = vld [vmem:[%s1952 + $0x38] sm:$0xf]
      %v1968 = vld [vmem:[%s1952 + $0x3c] sm:$0xf]
      %v1969 = vld [vmem:[%s1952 + $0x40] sm:$0xf]
      %v1970 = vld [vmem:[%s1952 + $0x44] sm:$0xf]
      %v1971 = vld [vmem:[%s1952 + $0x48] sm:$0xf]
      %v1972 = vld [vmem:[%s1952 + $0x4c] sm:$0xf]
      %v1973 = vld [vmem:[%s1952 + $0x50] sm:$0xf]
      %v1974 = vld [vmem:[%s1952 + $0x54] sm:$0xf]
      %v1975 = vld [vmem:[%s1952 + $0x58] sm:$0xf]
      %v1976 = vld [vmem:[%s1952 + $0x5c] sm:$0xf]
      %v1977 = vld [vmem:[%s1952 + $0x60] sm:$0xf]
      %v1978 = vld [vmem:[%s1952 + $0x64] sm:$0xf]
      %v1979 = vld [vmem:[%s1952 + $0x68] sm:$0xf]
      %v1980 = vld [vmem:[%s1952 + $0x6c] sm:$0xf]
      %v1981 = vld [vmem:[%s1952 + $0x70] sm:$0xf]
      %v1982 = vld [vmem:[%s1952 + $0x74] sm:$0xf]
      %v1983 = vld [vmem:[%s1952 + $0x78] sm:$0xf]
      %v1984 = vld [vmem:[%s1952 + $0x7c] sm:$0xf]
      %s1985 = smul.u32 %s31, 6
      %s1986 = smul.addr %s1985, 4
      %s1987 = scalar_lea.vmem %s5, %s1986
      %v1988 = vld [vmem:[%s1987] sm:$0xff]
      %v1989 = vld [vmem:[%s1987 + $0x8] sm:$0xff]
      %v1990 = vld [vmem:[%s1987 + $0x10] sm:$0xff]
      %v1991 = vld [vmem:[#allocation3] sm:$0xf]
      %v1992 = vld [vmem:[#allocation3 + $0x4] sm:$0xf]
      %v1993 = vld [vmem:[#allocation3 + $0x8] sm:$0xf]
      %v2026 = vunpack.c.l.b16 %v1953
      %v2027 = vunpack.c.l.b16 %v1954
      %v2028 = vunpack.c.l.b16 %v1955
      %v2029 = vunpack.c.l.b16 %v1956
      %v2030 = vunpack.c.l.b16 %v1957
      %v2031 = vunpack.c.l.b16 %v1958
      %v2032 = vunpack.c.l.b16 %v1959
      %v2033 = vunpack.c.l.b16 %v1960
      %v2034 = vunpack.c.l.b16 %v1961
      %v2035 = vunpack.c.l.b16 %v1962
      %v2036 = vunpack.c.l.b16 %v1963
      %v2037 = vunpack.c.l.b16 %v1964
      %v2038 = vunpack.c.l.b16 %v1965
      %v2039 = vunpack.c.l.b16 %v1966
      %v2040 = vunpack.c.l.b16 %v1967
      %v2041 = vunpack.c.l.b16 %v1968
      %v2042 = vunpack.c.l.b16 %v1969
      %v2043 = vunpack.c.l.b16 %v1970
      %v2044 = vunpack.c.l.b16 %v1971
      %v2045 = vunpack.c.l.b16 %v1972
      %v2046 = vunpack.c.l.b16 %v1973
      %v2047 = vunpack.c.l.b16 %v1974
      %v2048 = vunpack.c.l.b16 %v1975
      %v2049 = vunpack.c.l.b16 %v1976
      %v2050 = vunpack.c.l.b16 %v1977
      %v2051 = vunpack.c.l.b16 %v1978
      %v2052 = vunpack.c.l.b16 %v1979
      %v2053 = vunpack.c.l.b16 %v1980
      %v2054 = vunpack.c.l.b16 %v1981
      %v2055 = vunpack.c.l.b16 %v1982
      %v2056 = vunpack.c.l.b16 %v1983
      %v2057 = vunpack.c.l.b16 %v1984
      %v2058 = vpack.c.b16 %v2027, %v2026
      %v2059 = vpack.c.b16 %v2029, %v2028
      %v2060 = vpack.c.b16 %v2031, %v2030
      %v2061 = vpack.c.b16 %v2033, %v2032
      %v2062 = vpack.c.b16 %v2035, %v2034
      %v2063 = vpack.c.b16 %v2037, %v2036
      %v2064 = vpack.c.b16 %v2039, %v2038
      %v2065 = vpack.c.b16 %v2041, %v2040
      %v2066 = vpack.c.b16 %v2043, %v2042
      %v2067 = vpack.c.b16 %v2045, %v2044
      %v2068 = vpack.c.b16 %v2047, %v2046
      %v2069 = vpack.c.b16 %v2049, %v2048
      %v2070 = vpack.c.b16 %v2051, %v2050
      %v2071 = vpack.c.b16 %v2053, %v2052
      %v2072 = vpack.c.b16 %v2055, %v2054
      %v2073 = vpack.c.b16 %v2057, %v2056
      %v2077 = vunpack.c.l.b16 %v1991
      %v2078 = vunpack.c.l.b16 %v1992
      %v2079 = vunpack.c.l.b16 %v1993
      %v2080 = vpack.c.b16 %v2078, %v2077
      %v2081 = vpack.c.b16 %v2079, %v2079
      %vm2083 = vcmask 195584
      %v2085 = vsel %vm2083, %v2058, 0
      %v2088 = vsel %vm2083, %v2059, 0
      %v2091 = vsel %vm2083, %v2060, 0
      %v2094 = vsel %vm2083, %v2061, 0
      %v2097 = vsel %vm2083, %v2062, 0
      %v2100 = vsel %vm2083, %v2063, 0
      %v2103 = vsel %vm2083, %v2064, 0
      %v2106 = vsel %vm2083, %v2065, 0
      %v2109 = vsel %vm2083, %v2066, 0
      %v2112 = vsel %vm2083, %v2067, 0
      %v2115 = vsel %vm2083, %v2068, 0
      %v2118 = vsel %vm2083, %v2069, 0
      %v2121 = vsel %vm2083, %v2070, 0
      %v2124 = vsel %vm2083, %v2071, 0
      %v2127 = vsel %vm2083, %v2072, 0
      %v2130 = vsel %vm2083, %v2073, 0
      %vm2132 = vcmask 1043456
      %v2134 = vsel %vm2132, %v2081, 0
      %2136 = vmatprep.subr.bf16.mxu0 0
      %2137 = vmatpush1.bf16.msra.mxu0 0
      %2138 = vmatprep.subr.bf16.mxu0 0
      %2139 = vmatpush1.bf16.msra.mxu0 0
      %2140 = vmatprep.subr.bf16.mxu0 0
      %2141 = vmatpush1.bf16.msra.mxu0 0
      %2142 = vmatprep.subr.bf16.mxu0 0
      %2143 = vmatpush1.bf16.msra.mxu0 0
      %2144 = vmatprep.subr.bf16.mxu0 0
      %2145 = vmatpush1.bf16.msra.mxu0 0
      %2146 = vmatprep.subr.bf16.mxu0 0
      %2147 = vmatpush1.bf16.msra.mxu0 0
      %2148 = vmatprep.subr.bf16.mxu0 0
      %2149 = vmatpush1.bf16.msra.mxu0 %v2134
      %2150 = vmatprep.subr.bf16.mxu0 0
      %2151 = vmatpush1.bf16.msra.mxu0 %v2080
      %2152 = vmatprep.subr.bf16.mxu0 0
      %2153 = vmatpush2.bf16.msra.mxu0 0
      %2154 = vmatprep.subr.bf16.mxu0 0
      %2155 = vmatpush2.bf16.msra.mxu0 0
      %2156 = vmatprep.subr.bf16.mxu0 0
      %2157 = vmatpush2.bf16.msra.mxu0 0
      %2158 = vmatprep.subr.bf16.mxu0 0
      %2159 = vmatpush2.bf16.msra.mxu0 0
      %2160 = vmatprep.subr.bf16.mxu0 0
      %2161 = vmatpush2.bf16.msra.mxu0 0
      %2162 = vmatprep.subr.bf16.mxu0 0
      %2163 = vmatpush2.bf16.msra.mxu0 0
      %2164 = vmatprep.subr.bf16.mxu0 0
      %2165 = vmatpush2.bf16.msra.mxu0 0
      %2166 = vmatprep.subr.bf16.mxu0 0
      %2167 = vmatpush2.bf16.msra.mxu0 0
      %2168 = vmatprep.mubr.bf16.mxu0 0
      %2169 = vmatmul.mubr.bf16.gmra.mxu0 %v2085
      %v2170 = vpop.f32.mrf.mxu0
      %v2171 = vadd.f32 0.0, %v2170
      %v2172 = vpop.f32.mrf.mxu0
      %v2173 = vpop.f32.mrf.mxu0
      %v2174 = vadd.f32 0.0, %v2173
      %v2175 = vpop.f32.mrf.mxu0
      %2176 = vmatprep.mubr.bf16.mxu0 0
      %2177 = vmatmul.mubr.bf16.gmra.mxu0 %v2088
      %v2178 = vpop.f32.mrf.mxu0
      %v2179 = vadd.f32 0.0, %v2178
      %v2180 = vpop.f32.mrf.mxu0
      %v2181 = vpop.f32.mrf.mxu0
      %v2182 = vadd.f32 0.0, %v2181
      %v2183 = vpop.f32.mrf.mxu0
      %2184 = vmatprep.mubr.bf16.mxu0 0
      %2185 = vmatmul.mubr.bf16.gmra.mxu0 %v2091
      %v2186 = vpop.f32.mrf.mxu0
      %v2187 = vadd.f32 0.0, %v2186
      %v2188 = vpop.f32.mrf.mxu0
      %v2189 = vpop.f32.mrf.mxu0
      %v2190 = vadd.f32 0.0, %v2189
      %v2191 = vpop.f32.mrf.mxu0
      %2192 = vmatprep.mubr.bf16.mxu0 0
      %2193 = vmatmul.mubr.bf16.gmra.mxu0 %v2094
      %v2194 = vpop.f32.mrf.mxu0
      %v2195 = vadd.f32 0.0, %v2194
      %v2196 = vpop.f32.mrf.mxu0
      %v2197 = vpop.f32.mrf.mxu0
      %v2198 = vadd.f32 0.0, %v2197
      %v2199 = vpop.f32.mrf.mxu0
      %2200 = vmatprep.mubr.bf16.mxu0 0
      %2201 = vmatmul.mubr.bf16.gmra.mxu0 %v2097
      %v2202 = vpop.f32.mrf.mxu0
      %v2203 = vadd.f32 0.0, %v2202
      %v2204 = vpop.f32.mrf.mxu0
      %v2205 = vpop.f32.mrf.mxu0
      %v2206 = vadd.f32 0.0, %v2205
      %v2207 = vpop.f32.mrf.mxu0
      %2208 = vmatprep.mubr.bf16.mxu0 0
      %2209 = vmatmul.mubr.bf16.gmra.mxu0 %v2100
      %v2210 = vpop.f32.mrf.mxu0
      %v2211 = vadd.f32 0.0, %v2210
      %v2212 = vpop.f32.mrf.mxu0
      %v2213 = vpop.f32.mrf.mxu0
      %v2214 = vadd.f32 0.0, %v2213
      %v2215 = vpop.f32.mrf.mxu0
      %2216 = vmatprep.mubr.bf16.mxu0 0
      %2217 = vmatmul.mubr.bf16.gmra.mxu0 %v2103
      %v2218 = vpop.f32.mrf.mxu0
      %v2219 = vadd.f32 0.0, %v2218
      %v2220 = vpop.f32.mrf.mxu0
      %v2221 = vpop.f32.mrf.mxu0
      %v2222 = vadd.f32 0.0, %v2221
      %v2223 = vpop.f32.mrf.mxu0
      %2224 = vmatprep.mubr.bf16.mxu0 0
      %2225 = vmatmul.mubr.bf16.gmra.mxu0 %v2106
      %v2226 = vpop.f32.mrf.mxu0
      %v2227 = vadd.f32 0.0, %v2226
      %v2228 = vpop.f32.mrf.mxu0
      %v2229 = vpop.f32.mrf.mxu0
      %v2230 = vadd.f32 0.0, %v2229
      %v2231 = vpop.f32.mrf.mxu0
      %2232 = vmatprep.mubr.bf16.mxu0 0
      %2233 = vmatmul.mubr.bf16.gmra.mxu0 %v2109
      %v2234 = vpop.f32.mrf.mxu0
      %v2235 = vadd.f32 0.0, %v2234
      %v2236 = vpop.f32.mrf.mxu0
      %v2237 = vpop.f32.mrf.mxu0
      %v2238 = vadd.f32 0.0, %v2237
      %v2239 = vpop.f32.mrf.mxu0
      %2240 = vmatprep.mubr.bf16.mxu0 0
      %2241 = vmatmul.mubr.bf16.gmra.mxu0 %v2112
      %v2242 = vpop.f32.mrf.mxu0
      %v2243 = vadd.f32 0.0, %v2242
      %v2244 = vpop.f32.mrf.mxu0
      %v2245 = vpop.f32.mrf.mxu0
      %v2246 = vadd.f32 0.0, %v2245
      %v2247 = vpop.f32.mrf.mxu0
      %2248 = vmatprep.mubr.bf16.mxu0 0
      %2249 = vmatmul.mubr.bf16.gmra.mxu0 %v2115
      %v2250 = vpop.f32.mrf.mxu0
      %v2251 = vadd.f32 0.0, %v2250
      %v2252 = vpop.f32.mrf.mxu0
      %v2253 = vpop.f32.mrf.mxu0
      %v2254 = vadd.f32 0.0, %v2253
      %v2255 = vpop.f32.mrf.mxu0
      %2256 = vmatprep.mubr.bf16.mxu0 0
      %2257 = vmatmul.mubr.bf16.gmra.mxu0 %v2118
      %v2258 = vpop.f32.mrf.mxu0
      %v2259 = vadd.f32 0.0, %v2258
      %v2260 = vpop.f32.mrf.mxu0
      %v2261 = vpop.f32.mrf.mxu0
      %v2262 = vadd.f32 0.0, %v2261
      %v2263 = vpop.f32.mrf.mxu0
      %2264 = vmatprep.mubr.bf16.mxu0 0
      %2265 = vmatmul.mubr.bf16.gmra.mxu0 %v2121
      %v2266 = vpop.f32.mrf.mxu0
      %v2267 = vadd.f32 0.0, %v2266
      %v2268 = vpop.f32.mrf.mxu0
      %v2269 = vpop.f32.mrf.mxu0
      %v2270 = vadd.f32 0.0, %v2269
      %v2271 = vpop.f32.mrf.mxu0
      %2272 = vmatprep.mubr.bf16.mxu0 0
      %2273 = vmatmul.mubr.bf16.gmra.mxu0 %v2124
      %v2274 = vpop.f32.mrf.mxu0
      %v2275 = vadd.f32 0.0, %v2274
      %v2276 = vpop.f32.mrf.mxu0
      %v2277 = vpop.f32.mrf.mxu0
      %v2278 = vadd.f32 0.0, %v2277
      %v2279 = vpop.f32.mrf.mxu0
      %2280 = vmatprep.mubr.bf16.mxu0 0
      %2281 = vmatmul.mubr.bf16.gmra.mxu0 %v2127
      %v2282 = vpop.f32.mrf.mxu0
      %v2283 = vadd.f32 0.0, %v2282
      %v2284 = vpop.f32.mrf.mxu0
      %v2285 = vpop.f32.mrf.mxu0
      %v2286 = vadd.f32 0.0, %v2285
      %v2287 = vpop.f32.mrf.mxu0
      %2288 = vmatprep.mubr.bf16.mxu0 0
      %2289 = vmatmul.mubr.bf16.gmra.mxu0 %v2130
      %v2290 = vpop.f32.mrf.mxu0
      %v2291 = vadd.f32 0.0, %v2290
      %v2292 = vpop.f32.mrf.mxu0
      %v2293 = vpop.f32.mrf.mxu0
      %v2294 = vadd.f32 0.0, %v2293
      %v2295 = vpop.f32.mrf.mxu0
      %2296 = vdwg.mxu0
      %v2297 = vmul.f32 %v2171, %v1918
      %v2298 = vmul.f32 %v2174, %v1919
      %v2299 = vmul.f32 %v2179, %v1920
      %v2300 = vmul.f32 %v2182, %v1921
      %v2301 = vmul.f32 %v2187, %v1922
      %v2302 = vmul.f32 %v2190, %v1923
      %v2303 = vmul.f32 %v2195, %v1924
      %v2304 = vmul.f32 %v2198, %v1925
      %v2305 = vmul.f32 %v2203, %v1926
      %v2306 = vmul.f32 %v2206, %v1927
      %v2307 = vmul.f32 %v2211, %v1928
      %v2308 = vmul.f32 %v2214, %v1929
      %v2309 = vmul.f32 %v2219, %v1930
      %v2310 = vmul.f32 %v2222, %v1931
      %v2311 = vmul.f32 %v2227, %v1932
      %v2312 = vmul.f32 %v2230, %v1933
      %v2313 = vmul.f32 %v2235, %v1934
      %v2314 = vmul.f32 %v2238, %v1935
      %v2315 = vmul.f32 %v2243, %v1936
      %v2316 = vmul.f32 %v2246, %v1937
      %v2317 = vmul.f32 %v2251, %v1938
      %v2318 = vmul.f32 %v2254, %v1939
      %v2319 = vmul.f32 %v2259, %v1940
      %v2320 = vmul.f32 %v2262, %v1941
      %v2321 = vmul.f32 %v2267, %v1942
      %v2322 = vmul.f32 %v2270, %v1943
      %v2323 = vmul.f32 %v2275, %v1944
      %v2324 = vmul.f32 %v2278, %v1945
      %v2325 = vmul.f32 %v2283, %v1946
      %v2326 = vmul.f32 %v2286, %v1947
      %v2327 = vmul.f32 %v2291, %v1948
      %v2328 = vmul.f32 %v2294, %v1949
      %v2329 = vpack.c.bf16 %v2298, %v2297
      %v2330 = vpack.c.bf16 %v2300, %v2299
      %v2331 = vpack.c.bf16 %v2302, %v2301
      %v2332 = vpack.c.bf16 %v2304, %v2303
      %v2333 = vpack.c.bf16 %v2306, %v2305
      %v2334 = vpack.c.bf16 %v2308, %v2307
      %v2335 = vpack.c.bf16 %v2310, %v2309
      %v2336 = vpack.c.bf16 %v2312, %v2311
      %v2337 = vpack.c.bf16 %v2314, %v2313
      %v2338 = vpack.c.bf16 %v2316, %v2315
      %v2339 = vpack.c.bf16 %v2318, %v2317
      %v2340 = vpack.c.bf16 %v2320, %v2319
      %v2341 = vpack.c.bf16 %v2322, %v2321
      %v2342 = vpack.c.bf16 %v2324, %v2323
      %v2343 = vpack.c.bf16 %v2326, %v2325
      %v2344 = vpack.c.bf16 %v2328, %v2327
      %v2345 = vld [vmem:[#allocation4] sm:$0xff]
      %v2346 = vld [vmem:[#allocation4 + $0x8] sm:$0xff]
      %v2347 = vld [vmem:[#allocation4 + $0x10] sm:$0xff]
      %v2351 = vunpack.c.l.b16 %v1988
      %v2352 = vunpack.c.h.b16 %v1988
      %v2353 = vunpack.c.l.b16 %v1989
      %v2354 = vunpack.c.h.b16 %v1989
      %v2355 = vunpack.c.l.b16 %v1990
      %v2356 = vunpack.c.h.b16 %v1990
      %v2357 = vpack.c.b16 %v2353, %v2351
      %v2358 = vpack.c.b16 %v2354, %v2352
      %v2359 = vpack.c.b16 %v2355, %v2355
      %v2360 = vpack.c.b16 %v2356, %v2356
      %2365 = vmatprep.subr.bf16.mxu0 0
      %2366 = vmatpush1.bf16.msra.mxu0 %v2336
      %2367 = vmatprep.subr.bf16.mxu0 0
      %2368 = vmatpush1.bf16.msra.mxu0 %v2335
      %2369 = vmatprep.subr.bf16.mxu0 0
      %2370 = vmatpush1.bf16.msra.mxu0 %v2334
      %2371 = vmatprep.subr.bf16.mxu0 0
      %2372 = vmatpush1.bf16.msra.mxu0 %v2333
      %2373 = vmatprep.subr.bf16.mxu0 0
      %2374 = vmatpush1.bf16.msra.mxu0 %v2332
      %2375 = vmatprep.subr.bf16.mxu0 0
      %2376 = vmatpush1.bf16.msra.mxu0 %v2331
      %2377 = vmatprep.subr.bf16.mxu0 0
      %2378 = vmatpush1.bf16.msra.mxu0 %v2330
      %2379 = vmatprep.subr.bf16.mxu0 0
      %2380 = vmatpush1.bf16.msra.mxu0 %v2329
      %2381 = vmatprep.subr.bf16.mxu0 0
      %2382 = vmatpush2.bf16.msra.mxu0 %v2344
      %2383 = vmatprep.subr.bf16.mxu0 0
      %2384 = vmatpush2.bf16.msra.mxu0 %v2343
      %2385 = vmatprep.subr.bf16.mxu0 0
      %2386 = vmatpush2.bf16.msra.mxu0 %v2342
      %2387 = vmatprep.subr.bf16.mxu0 0
      %2388 = vmatpush2.bf16.msra.mxu0 %v2341
      %2389 = vmatprep.subr.bf16.mxu0 0
      %2390 = vmatpush2.bf16.msra.mxu0 %v2340
      %2391 = vmatprep.subr.bf16.mxu0 0
      %2392 = vmatpush2.bf16.msra.mxu0 %v2339
      %2393 = vmatprep.subr.bf16.mxu0 0
      %2394 = vmatpush2.bf16.msra.mxu0 %v2338
      %2395 = vmatprep.subr.bf16.mxu0 0
      %2396 = vmatpush2.bf16.msra.mxu0 %v2337
      %2397 = vmatprep.mubr.bf16.mxu0 %v2358
      %2398 = vmatmul.mubr.bf16.gmra.mxu0 %v2357
      %v2399 = vpop.f32.mrf.mxu0
      %v2400 = vadd.f32 0.0, %v2399
      %v2401 = vpop.f32.mrf.mxu0
      %v2402 = vpop.f32.mrf.mxu0
      %v2403 = vadd.f32 0.0, %v2402
      %v2404 = vpop.f32.mrf.mxu0
      %2405 = vmatprep.mubr.bf16.mxu0 %v2360
      %2406 = vmatmul.mubr.bf16.gmra.mxu0 %v2359
      %v2407 = vpop.f32.mrf.mxu0
      %v2408 = vadd.f32 0.0, %v2407
      %v2409 = vpop.f32.mrf.mxu0
      %v2410 = vpop.f32.mrf.mxu0
      %v2411 = vpop.f32.mrf.mxu0
      %2412 = vdwg.mxu0
      %v2413 = vadd.f32 %v2345, %v2400
      %v2414 = vadd.f32 %v2346, %v2403
      %v2415 = vadd.f32 %v2347, %v2408
      %2416 = vst.msk [vmem:[#allocation4] sm:$0xff] %vm1548, %v2413
      %2417 = vst.msk [vmem:[#allocation4 + $0x8] sm:$0xff] %vm1548, %v2414
      %2418 = vst.msk [vmem:[#allocation4 + $0x10] sm:$0xff] %vm1548, %v2415
      %p2419 = scmp.eq.s32.totalorder %s31, 1
      // Predicated region
      $region89: #{tpu_custom_call.1} parent=79 // pred_check
        %p2420 = pneg %p2419
      $region90: #{tpu_custom_call.1} parent=79 // pred_check_branch
        %2422 = sbr.rel (%p2420) target = $region92
      $region91: #{tpu_custom_call.1} parent=79 // pred_region
        %v2423 = vld [vmem:[#allocation4] sm:$0xff]
        %v2424 = vld [vmem:[#allocation4 + $0x8] sm:$0xff]
        %v2425 = vld [vmem:[#allocation4 + $0x10] sm:$0xff]
        %v2426 = vpack.c.bf16 %v2424, %v2423
        %v2427 = vpack.c.bf16 %v2425, %v2425
        %v2428 = vld [vmem:[%s623] sm:$0xf]
        %v2429 = vld [vmem:[%s623 + $0x4] sm:$0xf]
        %v2430 = vld [vmem:[%s623 + $0x8] sm:$0xf]
        %v2431 = vld [vmem:[%s623 + $0xc] sm:$0xf]
        %v2432 = vlaneseq
        %v2433 = vshrl.u32 %v2432, 7
        %v2434 = vsub.s32 2, %v2433
        %v2435 = vrot.slane %v635, %v2434
        %v2440 = vunpack.c.l.b16 %v2428
        %v2441 = vunpack.c.l.b16 %v2429
        %v2442 = vunpack.c.l.b16 %v2430
        %v2443 = vunpack.c.l.b16 %v2431
        %v2444 = vpack.c.b16 %v2441, %v2440
        %v2445 = vpack.c.b16 %v2443, %v2442
        %v2449 = vsel %vm1548, %v2426, 0
        %v2452 = vsel %vm1548, %v2427, 0
        %2454 = vmatprep.subr.bf16.mxu0 0
        %2455 = vmatpush1.bf16.msra.mxu0 0
        %2456 = vmatprep.subr.bf16.mxu0 0
        %2457 = vmatpush1.bf16.msra.mxu0 0
        %2458 = vmatprep.subr.bf16.mxu0 0
        %2459 = vmatpush1.bf16.msra.mxu0 0
        %2460 = vmatprep.subr.bf16.mxu0 0
        %2461 = vmatpush1.bf16.msra.mxu0 0
        %2462 = vmatprep.subr.bf16.mxu0 0
        %2463 = vmatpush1.bf16.msra.mxu0 0
        %2464 = vmatprep.subr.bf16.mxu0 0
        %2465 = vmatpush1.bf16.msra.mxu0 0
        %2466 = vmatprep.subr.bf16.mxu0 0
        %2467 = vmatpush1.bf16.msra.mxu0 %v2445
        %2468 = vmatprep.subr.bf16.mxu0 0
        %2469 = vmatpush1.bf16.msra.mxu0 %v2444
        %2470 = vmatprep.subr.bf16.mxu0 0
        %2471 = vmatpush2.bf16.msra.mxu0 0
        %2472 = vmatprep.subr.bf16.mxu0 0
        %2473 = vmatpush2.bf16.msra.mxu0 0
        %2474 = vmatprep.subr.bf16.mxu0 0
        %2475 = vmatpush2.bf16.msra.mxu0 0
        %2476 = vmatprep.subr.bf16.mxu0 0
        %2477 = vmatpush2.bf16.msra.mxu0 0
        %2478 = vmatprep.subr.bf16.mxu0 0
        %2479 = vmatpush2.bf16.msra.mxu0 0
        %2480 = vmatprep.subr.bf16.mxu0 0
        %2481 = vmatpush2.bf16.msra.mxu0 0
        %2482 = vmatprep.subr.bf16.mxu0 0
        %2483 = vmatpush2.bf16.msra.mxu0 0
        %2484 = vmatprep.subr.bf16.mxu0 0
        %2485 = vmatpush2.bf16.msra.mxu0 0
        %2486 = vmatprep.mubr.bf16.mxu0 0
        %2487 = vmatmul.mubr.bf16.gmra.mxu0 %v2449
        %v2488 = vpop.f32.mrf.mxu0
        %v2489 = vadd.f32 %v2435, %v2488
        %v2490 = vpop.f32.mrf.mxu0
        %v2491 = vpop.f32.mrf.mxu0
        %v2492 = vadd.f32 %v2435, %v2491
        %v2493 = vpop.f32.mrf.mxu0
        %2494 = vmatprep.mubr.bf16.mxu0 0
        %2495 = vmatmul.mubr.bf16.gmra.mxu0 %v2452
        %v2496 = vpop.f32.mrf.mxu0
        %v2497 = vadd.f32 %v2435, %v2496
        %v2498 = vpop.f32.mrf.mxu0
        %v2499 = vpop.f32.mrf.mxu0
        %v2500 = vpop.f32.mrf.mxu0
        %2501 = vdwg.mxu0
        %v2502 = vmax.f32 %v2489, 0.0
        %v2503 = vmax.f32 %v2492, 0.0
        %v2504 = vmax.f32 %v2497, 0.0
        %v2505 = vand.u32 2147483647, %v2489
        %v2506 = vand.u32 2147483647, %v2492
        %v2507 = vand.u32 2147483647, %v2497
        %v2508 = vsub.f32 0.0, %v2505
        %v2509 = vsub.f32 0.0, %v2506
        %v2510 = vsub.f32 0.0, %v2507
        %v2511 = vmul.f32 %v2508, 1.442695
        %v2512 = vpow.pop %v2511
        %v2513 = vmul.f32 %v2509, 1.442695
        %v2514 = vpow.pop %v2513
        %v2515 = vmul.f32 %v2510, 1.442695
        %v2516 = vpow.pop %v2515
        %v2517 = vadd.f32 %v2512, 1.0
        %v2518 = vadd.f32 %v2514, 1.0
        %v2519 = vadd.f32 %v2516, 1.0
        %v2520 = vlog2.pop %v2517
        %v2521 = vmul.f32 %v2520, 0.6931472
        %v2522 = vlog2.pop %v2518
        %v2523 = vmul.f32 %v2522, 0.6931472
        %v2524 = vlog2.pop %v2519
        %v2525 = vmul.f32 %v2524, 0.6931472
        %v2526 = vadd.f32 %v2502, %v2521
        %v2527 = vadd.f32 %v2503, %v2523
        %v2528 = vadd.f32 %v2504, %v2525
        %v2529 = vsub.f32 %v2526, 0.6931472
        %v2530 = vsub.f32 %v2527, 0.6931472
        %v2531 = vsub.f32 %v2528, 0.6931472
        %v2532 = vpack.c.bf16 %v2530, %v2529
        %v2533 = vpack.c.bf16 %v2531, %v2531
        %v2534 = vld [vmem:[%s628] sm:$0xf]
        %v2535 = vld [vmem:[%s628 + $0x4] sm:$0xf]
        %v2536 = vld [vmem:[%s628 + $0x8] sm:$0xf]
        %v2537 = vld [vmem:[%s628 + $0xc] sm:$0xf]
        %v2538 = vlaneseq
        %v2539 = vshrl.u32 %v2538, 7
        %v2540 = vsub.s32 3, %v2539
        %v2541 = vrot.slane %v635, %v2540
        %v2546 = vunpack.c.l.b16 %v2534
        %v2547 = vunpack.c.l.b16 %v2535
        %v2548 = vunpack.c.l.b16 %v2536
        %v2549 = vunpack.c.l.b16 %v2537
        %v2550 = vpack.c.b16 %v2547, %v2546
        %v2551 = vpack.c.b16 %v2549, %v2548
        %v2555 = vsel %vm1548, %v2532, 0
        %v2558 = vsel %vm1548, %v2533, 0
        %2560 = vmatprep.subr.bf16.mxu0 0
        %2561 = vmatpush1.bf16.msra.mxu0 0
        %2562 = vmatprep.subr.bf16.mxu0 0
        %2563 = vmatpush1.bf16.msra.mxu0 0
        %2564 = vmatprep.subr.bf16.mxu0 0
        %2565 = vmatpush1.bf16.msra.mxu0 0
        %2566 = vmatprep.subr.bf16.mxu0 0
        %2567 = vmatpush1.bf16.msra.mxu0 0
        %2568 = vmatprep.subr.bf16.mxu0 0
        %2569 = vmatpush1.bf16.msra.mxu0 0
        %2570 = vmatprep.subr.bf16.mxu0 0
        %2571 = vmatpush1.bf16.msra.mxu0 0
        %2572 = vmatprep.subr.bf16.mxu0 0
        %2573 = vmatpush1.bf16.msra.mxu0 %v2551
        %2574 = vmatprep.subr.bf16.mxu0 0
        %2575 = vmatpush1.bf16.msra.mxu0 %v2550
        %2576 = vmatprep.subr.bf16.mxu0 0
        %2577 = vmatpush2.bf16.msra.mxu0 0
        %2578 = vmatprep.subr.bf16.mxu0 0
        %2579 = vmatpush2.bf16.msra.mxu0 0
        %2580 = vmatprep.subr.bf16.mxu0 0
        %2581 = vmatpush2.bf16.msra.mxu0 0
        %2582 = vmatprep.subr.bf16.mxu0 0
        %2583 = vmatpush2.bf16.msra.mxu0 0
        %2584 = vmatprep.subr.bf16.mxu0 0
        %2585 = vmatpush2.bf16.msra.mxu0 0
        %2586 = vmatprep.subr.bf16.mxu0 0
        %2587 = vmatpush2.bf16.msra.mxu0 0
        %2588 = vmatprep.subr.bf16.mxu0 0
        %2589 = vmatpush2.bf16.msra.mxu0 0
        %2590 = vmatprep.subr.bf16.mxu0 0
        %2591 = vmatpush2.bf16.msra.mxu0 0
        %2592 = vmatprep.mubr.bf16.mxu0 0
        %2593 = vmatmul.mubr.bf16.gmra.mxu0 %v2555
        %v2594 = vpop.f32.mrf.mxu0
        %v2595 = vadd.f32 %v2541, %v2594
        %v2596 = vpop.f32.mrf.mxu0
        %v2597 = vpop.f32.mrf.mxu0
        %v2598 = vadd.f32 %v2541, %v2597
        %v2599 = vpop.f32.mrf.mxu0
        %2600 = vmatprep.mubr.bf16.mxu0 0
        %2601 = vmatmul.mubr.bf16.gmra.mxu0 %v2558
        %v2602 = vpop.f32.mrf.mxu0
        %v2603 = vadd.f32 %v2541, %v2602
        %v2604 = vpop.f32.mrf.mxu0
        %v2605 = vpop.f32.mrf.mxu0
        %v2606 = vpop.f32.mrf.mxu0
        %2607 = vdwg.mxu0
        %v2608 = vld [vmem:[#allocation2] sm:$0xff]
        %v2609 = vld [vmem:[#allocation2 + $0x8] sm:$0xff]
        %v2610 = vld [vmem:[#allocation2 + $0x10] sm:$0xff]
        %v2611 = vadd.f32 %v2608, %v2595
        %v2612 = vadd.f32 %v2609, %v2598
        %v2613 = vadd.f32 %v2610, %v2603
        %v2614 = vlaneseq
        %v2615 = vshrl.u32 %v2614, 7
        %v2616 = vsub.s32 4, %v2615
        %v2617 = vrot.slane %v635, %v2616
        %v2618 = vmul.f32 %v2611, %v2617
        %v2619 = vmul.f32 %v2612, %v2617
        %v2620 = vmul.f32 %v2613, %v2617
        %v2621 = vlaneseq
        %v2622 = vshrl.u32 %v2621, 7
        %v2623 = vsub.s32 5, %v2622
        %v2624 = vrot.slane %v635, %v2623
        %v2625 = vadd.f32 %v2618, %v2624
        %v2626 = vadd.f32 %v2619, %v2624
        %v2627 = vadd.f32 %v2620, %v2624
        %2628 = vst.msk [vmem:[#allocation2] sm:$0xff] %vm1548, %v2625
        %2629 = vst.msk [vmem:[#allocation2 + $0x8] sm:$0xff] %vm1548, %v2626
        %2630 = vst.msk [vmem:[#allocation2 + $0x10] sm:$0xff] %vm1548, %v2627
      $region92: #{tpu_custom_call.1} parent=79 // pred_fallthru
        _
      %p2631 = scmp.eq.s32.totalorder %s30, 2
      %p2632 = pnand %p2631, %p2419
      %p2633 = pneg %p2632
      // Predicated region
      $region93: #{tpu_custom_call.1} parent=79 // pred_check
        _
      $region94: #{tpu_custom_call.1} parent=79 // pred_check_branch
        %2635 = sbr.rel (%p2632) target = $region96
      $region95: #{tpu_custom_call.1} parent=79 // pred_region
        %v2636 = vld [vmem:[#allocation2] sm:$0xff]
        %v2637 = vld [vmem:[#allocation2 + $0x8] sm:$0xff]
        %v2638 = vld [vmem:[#allocation2 + $0x10] sm:$0xff]
        %v2639 = vld [vmem:[%s1] sm:$0x3]
        %v2641 = vsel %vm2083, %v2639, 0
        %2643 = vmatprep.subr.mxu0 0.0
        %2644 = vmatpush1.msra.mxu0 0.0
        %2645 = vmatprep.subr.mxu0 0.0
        %2646 = vmatpush1.msra.mxu0 0.0
        %2647 = vmatprep.subr.mxu0 0.0
        %2648 = vmatpush1.msra.mxu0 0.0
        %2649 = vmatprep.subr.mxu0 0.0
        %2650 = vmatpush1.msra.mxu0 0.0
        %2651 = vmatprep.subr.mxu0 0.0
        %2652 = vmatpush1.msra.mxu0 0.0
        %2653 = vmatprep.subr.mxu0 0.0
        %2654 = vmatpush1.msra.mxu0 0.0
        %2655 = vmatprep.subr.mxu0 0.0
        %2656 = vmatpush1.msra.mxu0 0.0
        %2657 = vmatprep.subr.mxu0 0.0
        %2658 = vmatpush1.msra.mxu0 0.0
        %2659 = vmatprep.subr.mxu0 0.0
        %2660 = vmatpush1.msra.mxu0 0.0
        %2661 = vmatprep.subr.mxu0 0.0
        %2662 = vmatpush1.msra.mxu0 0.0
        %2663 = vmatprep.subr.mxu0 0.0
        %2664 = vmatpush1.msra.mxu0 0.0
        %2665 = vmatprep.subr.mxu0 0.0
        %2666 = vmatpush1.msra.mxu0 0.0
        %2667 = vmatprep.subr.mxu0 0.0
        %2668 = vmatpush1.msra.mxu0 0.0
        %2669 = vmatprep.subr.mxu0 0.0
        %2670 = vmatpush1.msra.mxu0 %v2638
        %2671 = vmatprep.subr.mxu0 0.0
        %2672 = vmatpush1.msra.mxu0 %v2637
        %2673 = vmatprep.subr.mxu0 0.0
        %2674 = vmatpush1.msra.mxu0 %v2636
        %2675 = vmatprep.subr.mxu0 0.0
        %2676 = vmatpush2.msra.mxu0 0.0
        %2677 = vmatprep.subr.mxu0 0.0
        %2678 = vmatpush2.msra.mxu0 0.0
        %2679 = vmatprep.subr.mxu0 0.0
        %2680 = vmatpush2.msra.mxu0 0.0
        %2681 = vmatprep.subr.mxu0 0.0
        %2682 = vmatpush2.msra.mxu0 0.0
        %2683 = vmatprep.subr.mxu0 0.0
        %2684 = vmatpush2.msra.mxu0 0.0
        %2685 = vmatprep.subr.mxu0 0.0
        %2686 = vmatpush2.msra.mxu0 0.0
        %2687 = vmatprep.subr.mxu0 0.0
        %2688 = vmatpush2.msra.mxu0 0.0
        %2689 = vmatprep.subr.mxu0 0.0
        %2690 = vmatpush2.msra.mxu0 0.0
        %2691 = vmatprep.subr.mxu0 0.0
        %2692 = vmatpush2.msra.mxu0 0.0
        %2693 = vmatprep.subr.mxu0 0.0
        %2694 = vmatpush2.msra.mxu0 0.0
        %2695 = vmatprep.subr.mxu0 0.0
        %2696 = vmatpush2.msra.mxu0 0.0
        %2697 = vmatprep.subr.mxu0 0.0
        %2698 = vmatpush2.msra.mxu0 0.0
        %2699 = vmatprep.subr.mxu0 0.0
        %2700 = vmatpush2.msra.mxu0 0.0
        %2701 = vmatprep.subr.mxu0 0.0
        %2702 = vmatpush2.msra.mxu0 0.0
        %2703 = vmatprep.subr.mxu0 0.0
        %2704 = vmatpush2.msra.mxu0 0.0
        %2705 = vmatprep.subr.mxu0 0.0
        %2706 = vmatpush2.msra.mxu0 0.0
        %2707 = vmatprep.mubr.f32.mxu0 0.0
        %2708 = vmatmul.mubr.f32.gmra.mxu0 %v2641
        %v2709 = vpop.f32.mrf.mxu0
        %v2710 = vadd.f32 0.0, %v2709
        %v2711 = vpop.f32.mrf.mxu0
        %2712 = vdwg.mxu0
        %v2713 = vpack.c.bf16 %v2710, %v2710
        %v2714 = vld [vmem:[%s13] sm:$0xf]
        %v2715 = vld [vmem:[%s13 + $0x4] sm:$0xf]
        %v2716 = vld [vmem:[%s13 + $0x8] sm:$0xf]
        %v2717 = vld [vmem:[%s13 + $0xc] sm:$0xf]
        %v2718 = vlaneseq
        %v2719 = vshrl.u32 %v2718, 7
        %v2720 = vsub.s32 1, %v2719
        %v2721 = vrot.slane %v634, %v2720
        %v2726 = vunpack.c.l.b16 %v2714
        %v2727 = vunpack.c.l.b16 %v2715
        %v2728 = vunpack.c.l.b16 %v2716
        %v2729 = vunpack.c.l.b16 %v2717
        %v2730 = vpack.c.b16 %v2727, %v2726
        %v2731 = vpack.c.b16 %v2729, %v2728
        %v2735 = vsel %vm1548, %v2713, 0
        %2737 = vmatprep.subr.bf16.mxu0 0
        %2738 = vmatpush1.bf16.msra.mxu0 0
        %2739 = vmatprep.subr.bf16.mxu0 0
        %2740 = vmatpush1.bf16.msra.mxu0 0
        %2741 = vmatprep.subr.bf16.mxu0 0
        %2742 = vmatpush1.bf16.msra.mxu0 0
        %2743 = vmatprep.subr.bf16.mxu0 0
        %2744 = vmatpush1.bf16.msra.mxu0 0
        %2745 = vmatprep.subr.bf16.mxu0 0
        %2746 = vmatpush1.bf16.msra.mxu0 0
        %2747 = vmatprep.subr.bf16.mxu0 0
        %2748 = vmatpush1.bf16.msra.mxu0 0
        %2749 = vmatprep.subr.bf16.mxu0 0
        %2750 = vmatpush1.bf16.msra.mxu0 %v2731
        %2751 = vmatprep.subr.bf16.mxu0 0
        %2752 = vmatpush1.bf16.msra.mxu0 %v2730
        %2753 = vmatprep.subr.bf16.mxu0 0
        %2754 = vmatpush2.bf16.msra.mxu0 0
        %2755 = vmatprep.subr.bf16.mxu0 0
        %2756 = vmatpush2.bf16.msra.mxu0 0
        %2757 = vmatprep.subr.bf16.mxu0 0
        %2758 = vmatpush2.bf16.msra.mxu0 0
        %2759 = vmatprep.subr.bf16.mxu0 0
        %2760 = vmatpush2.bf16.msra.mxu0 0
        %2761 = vmatprep.subr.bf16.mxu0 0
        %2762 = vmatpush2.bf16.msra.mxu0 0
        %2763 = vmatprep.subr.bf16.mxu0 0
        %2764 = vmatpush2.bf16.msra.mxu0 0
        %2765 = vmatprep.subr.bf16.mxu0 0
        %2766 = vmatpush2.bf16.msra.mxu0 0
        %2767 = vmatprep.subr.bf16.mxu0 0
        %2768 = vmatpush2.bf16.msra.mxu0 0
        %2769 = vmatprep.mubr.bf16.mxu0 0
        %2770 = vmatmul.mubr.bf16.gmra.mxu0 %v2735
        %v2771 = vpop.f32.mrf.mxu0
        %v2772 = vadd.f32 %v2721, %v2771
        %v2773 = vpop.f32.mrf.mxu0
        %v2774 = vpop.f32.mrf.mxu0
        %v2775 = vpop.f32.mrf.mxu0
        %2776 = vdwg.mxu0
        %v2777 = vmax.f32 %v2772, 0.0
        %v2778 = vlaneseq
        %v2779 = vshrl.u32 %v2778, 7
        %v2780 = vsub.s32 2, %v2779
        %v2781 = vrot.slane %v634, %v2780
        %v2782 = vmul.f32 %v2777, %v2781
        %vm2783 = vcmask 254976
        %v2784 = vsel %vm2783, %v2782, 0.0
        %2785 = vadd.xlane.f32.xlu0 %v2784
        %v2786 = vpop.xlane.xlu0 %2785
        %v2787 = vlaneseq
        %v2788 = vshrl.u32 %v2787, 7
        %v2789 = vsub.s32 3, %v2788
        %v2790 = vrot.slane %v634, %v2789
        %v2791 = vadd.f32 %v2786, %v2790
        %vm2792 = vcmask 1024
        %2793 = vst.msk [vmem:[%s15] sm:$0x3] %vm2792, %v2791
      $region96: #{tpu_custom_call.1} parent=79 // pred_fallthru
        _
      // Predicated region
      $region97: #{tpu_custom_call.1} parent=79 // pred_check
        %p2794 = pneg %p406
      $region98: #{tpu_custom_call.1} parent=79 // pred_check_branch
        %2796 = sbr.rel (%p2794) target = $region100
      $region99: #{tpu_custom_call.1} parent=79 // pred_region
        _
      $region100: #{tpu_custom_call.1} parent=79 // pred_fallthru
        _
      // Predicated region
      $region101: #{tpu_custom_call.1} parent=79 // pred_check
        %p2797 = pneg %p406
      $region102: #{tpu_custom_call.1} parent=79 // pred_check_branch
        %2799 = sbr.rel (%p2797) target = $region104
      $region103: #{tpu_custom_call.1} parent=79 // pred_region
        _
      $region104: #{tpu_custom_call.1} parent=79 // pred_fallthru
        _
    $region80: #{tpu_custom_call.1} parent=5 // pred_fallthru
      _
    %p2800 = scmp.le.s32.totalorder 2, %s21
    // Predicated region
    $region105: #{tpu_custom_call.1} parent=5 // pred_check
      %p2801 = pneg %p2800
    $region106: #{tpu_custom_call.1} parent=5 // pred_check_branch
      %2803 = sbr.rel (%p2801) target = $region108
    $region107: #{tpu_custom_call.1} parent=5 // pred_region
      %s2804 = ssub.s32 %s21, 2
    $region108: #{tpu_custom_call.1} parent=5 // pred_fallthru
      _
  $region6: #{tpu_custom_call.1} parent=0 // loop_footer
    %s25 = sadd.s32 1, %s21
  $region7: #{tpu_custom_call.1} parent=0 // loop_footer_branch
    %20 = sbr.rel target = $region3
  $region8: #{tpu_custom_call.1} parent=0 // loop_exit
    _

</llo_original>
